<compile_context>
chip_gen: v6e
topology: v6e:2x2x1
jax: 0.10.0
libtpu: 0.0.40
codegen_flags: <defaults>
</compile_context>

<pallas_src>
import math
import functools

import jax
import jax.numpy as jnp
from jax import lax
from jax.experimental import pallas as pl
from jax.experimental.pallas import tpu as pltpu


def _con_gat_kernel(q_ref, k1_ref, k2_ref, v1_ref, v2_ref,
                    m1_ref, m2_ref, n2c_ref, c2n_ref, o_ref,
                    *, nhead, d_att, dv, tile_m, n_nodes, gather_chunk):
    f32 = jnp.float32
    bf16 = jnp.bfloat16
    M = tile_m
    N = n_nodes
    KH = nhead * d_att          # per-view K/Q width (all heads)

    q_all = q_ref[...]          # (M, 2*KH) bf16, [q1|q2], 1/sqrt(d) pre-folded
    k1 = k1_ref[...]            # (N, KH) bf16
    k2 = k2_ref[...]
    v1 = v1_ref[...]            # (N, VH) bf16
    v2 = v2_ref[...]
    m1 = m1_ref[...]            # (M, N) f32 additive masks (precomputed on host)
    m2 = m2_ref[...]
    n2c = n2c_ref[...]          # (M, N) i32 column-index maps
    c2n = c2n_ref[...]

    dn = (((1,), (1,)), ((), ()))   # contract feature dim: (M,d)x(N,d) -> (M,N)

    # Per-head raw scores on the MXU (f32 accumulation); nhead is small ->
    # static unroll.
    s1 = []
    s2 = []
    for h in range(nhead):
        sl = slice(h * d_att, (h + 1) * d_att)
        s1.append(lax.dot_general(q_all[:, sl], k1[:, sl], dn,
                                  preferred_element_type=f32))              # (M, N)
        s2.append(lax.dot_general(q_all[:, KH + h * d_att:KH + (h + 1) * d_att],
                                  k2[:, sl], dn, preferred_element_type=f32))

    # Cross-view score gather:
    #   g12[h][i, j] = s2[h][i, c2n[i, j]]   (feeds view-1 logits)
    #   g21[h][i, j] = s1[h][i, n2c[i, j]]   (feeds view-2 logits)
    # One-hot compare against a lane iota (shared across heads), select the
    # broadcast score row and reduce over the lane axis; chunked over j so
    # residency is (M, Nj, N) bool instead of (M, N, N) f32.
    col = lax.broadcasted_iota(jnp.int32, (1, 1, N), 2)
    g12_parts = [[] for _ in range(nhead)]
    g21_parts = [[] for _ in range(nhead)]
    for j0 in range(0, N, gather_chunk):
        nj = min(gather_chunk, N - j0)
        eq2 = c2n[:, j0:j0 + nj][:, :, None] == col      # (M, nj, N) bool
        eq1 = n2c[:, j0:j0 + nj][:, :, None] == col
        for h in range(nhead):
            g12_parts[h].append(
                jnp.sum(jnp.where(eq2, s2[h][:, None, :], 0.0), axis=-1))   # (M, nj)
            g21_parts[h].append(
                jnp.sum(jnp.where(eq1, s1[h][:, None, :], 0.0), axis=-1))

    def cat(parts):
        return parts[0] if len(parts) == 1 else jnp.concatenate(parts, axis=1)

    def softmax_last(a):
        mx = jnp.max(a, axis=-1, keepdims=True)
        e = jnp.exp(a - mx)
        return e * pl.reciprocal(jnp.sum(e, axis=-1, keepdims=True), approx=True)

    outs1 = []
    outs2 = []
    for h in range(nhead):
        a1 = softmax_last(s1[h] + cat(g12_parts[h]) + m1)
        a2 = softmax_last(s2[h] + cat(g21_parts[h]) + m2)
        # TODO(synk): attention dropout (p=0.1) treated as identity (eval-mode semantics).
        vsl = slice(h * dv, (h + 1) * dv)
        outs1.append(jnp.dot(a1.astype(bf16), v1[:, vsl], preferred_element_type=f32))
        outs2.append(jnp.dot(a2.astype(bf16), v2[:, vsl], preferred_element_type=f32))

    # Single lane-dense store per grid step, node-major [view1 heads | view2
    # heads] — matches permute(1,0,2)+view+cat of the torch code.
    o_ref[...] = jnp.concatenate(outs1 + outs2, axis=1).astype(o_ref.dtype)


def con_gat_layer(x, params, fst_graph, sec_graph, n2c, c2n,
                  *, nhead, att_feats, dv, tile_m=None, gather_chunk=None):
    """Pallas implementation of CON_GATLayer.forward (eval mode)."""
    N, in_feats = x.shape
    (wq1, bq1, wk1, bk1, wv1, bv1, wq2, bq2, wk2, bk2, wv2, bv2) = params

    f32 = jnp.float32
    bf16 = jnp.bfloat16
    inv = 1.0 / math.sqrt(att_feats)

    # Projections hoisted out of the kernel grid (computed once in XLA).
    # The 1/sqrt(att_features) score scale is folded into Q.
    q_all = ((x @ jnp.concatenate([wq1, wq2], axis=1)
              + jnp.concatenate([bq1, bq2])[None, :]) * inv).astype(bf16)   # (N, 2*KH)
    k1 = (x @ wk1 + bk1[None, :]).astype(bf16)                              # (N, KH)
    k2 = (x @ wk2 + bk2[None, :]).astype(bf16)
    v1 = (x @ wv1 + bv1[None, :]).astype(bf16)                              # (N, VH)
    v2 = (x @ wv2 + bv2[None, :]).astype(bf16)

    # Additive masks precomputed on the host (kernel only adds them).
    mask1 = ((fst_graph.T - 1.0) * 10000.0).astype(f32)
    mask2 = ((sec_graph.T - 1.0) * 10000.0).astype(f32)
    n2c_i = n2c.astype(jnp.int32)
    c2n_i = c2n.astype(jnp.int32)

    if tile_m is None:
        tile_m = N if N <= 128 else 128
        # Give the parallel axis >=2 blocks when N allows, so both v7x
        # TensorCores get work (no effect on v5e/v6e single-TC).
        if tile_m == N and N >= 16 and (N // 2) % 8 == 0:
            tile_m = N // 2
    assert N % tile_m == 0, "node count must be a multiple of the row tile"
    assert tile_m == N or tile_m % 8 == 0, "row tile must be a multiple of 8"
    if gather_chunk is None:
        gather_chunk = min(N, 256)   # use 128 on v7x (64 MiB VMEM)
    grid = (N // tile_m,)

    KH = nhead * att_feats
    VH = nhead * dv
    OUTW = 2 * VH

    kernel = functools.partial(_con_gat_kernel, nhead=nhead, d_att=att_feats,
                               dv=dv, tile_m=tile_m, n_nodes=N,
                               gather_chunk=gather_chunk)

    def row_blk(cols):
        return pl.BlockSpec((tile_m, cols), lambda i: (i, 0))

    def full_blk(rows, cols):
        return pl.BlockSpec((rows, cols), lambda i: (0, 0))

    out = pl.pallas_call(
        kernel,
        out_shape=jax.ShapeDtypeStruct((N, OUTW), jnp.float32),
        grid_spec=pltpu.PrefetchScalarGridSpec(
            num_scalar_prefetch=0,
            grid=grid,
            in_specs=[
                row_blk(2 * KH),      # q rows [q1|q2] (pre-scaled, bf16)
                full_blk(N, KH),      # k1 (all rows, resident across steps)
                full_blk(N, KH),      # k2
                full_blk(N, VH),      # v1
                full_blk(N, VH),      # v2
                row_blk(N),           # additive mask view 1
                row_blk(N),           # additive mask view 2
                row_blk(N),           # n2c rows
                row_blk(N),           # c2n rows
            ],
            out_specs=pl.BlockSpec((tile_m, OUTW), lambda i: (i, 0)),
        ),
        compiler_params=pltpu.CompilerParams(
            # Row blocks are fully independent -> shard across v7x's 2 TCs.
            dimension_semantics=("parallel",),
            # For large N on v5e/v6e raise vmem_limit_bytes (e.g. 64<<20);
            # on v7x keep the default and shrink tile_m/gather_chunk instead.
        ),
    )(q_all, k1, k2, v1, v2, mask1, mask2, n2c_i, c2n_i)
    return out


def reference(x, params, fst_graph, sec_graph, n2c, c2n, nhead, att_feats, dv):
    """Pure-JAX (f32) replica of the PyTorch forward (eval mode) for validation."""
    (wq1, bq1, wk1, bk1, wv1, bv1, wq2, bq2, wk2, bk2, wv2, bv2) = params
    N = x.shape[0]

    def tfs(y):
        return y.reshape(N, nhead, -1).transpose(1, 0, 2)

    q1 = tfs(x @ wq1 + bq1); k1 = tfs(x @ wk1 + bk1); v1 = tfs(x @ wv1 + bv1)
    q2 = tfs(x @ wq2 + bq2); k2 = tfs(x @ wk2 + bk2); v2 = tfs(x @ wv2 + bv2)
    s1 = jnp.einsum('hnd,hmd->hnm', q1, k1) / math.sqrt(att_feats)
    s2 = jnp.einsum('hnd,hmd->hnm', q2, k2) / math.sqrt(att_feats)
    g12 = jnp.take_along_axis(s2, jnp.broadcast_to(c2n[None], (nhead, N, N)), axis=2)
    g21 = jnp.take_along_axis(s1, jnp.broadcast_to(n2c[None], (nhead, N, N)), axis=2)
    m1 = (fst_graph.T - 1.0) * 10000.0
    m2 = (sec_graph.T - 1.0) * 10000.0
    a1 = jax.nn.softmax(s1 + g12 + m1, axis=-1)
    a2 = jax.nn.softmax(s2 + g21 + m2, axis=-1)
    v1o = jnp.einsum('hnm,hmd->hnd', a1, v1)
    v2o = jnp.einsum('hnm,hmd->hnd', a2, v2)
    vec1 = v1o.transpose(1, 0, 2).reshape(N, -1)
    vec2 = v2o.transpose(1, 0, 2).reshape(N, -1)
    return jnp.concatenate([vec1, vec2], axis=1)


if __name__ == "__main__":
    # Module hyperparams (small, consistent with CON_GATLayer asserts).
    N = 8                      # node_num
    in_feats = 32
    out_feats = 32
    atten_feats = 16
    nhead = 2
    d_att = atten_feats // nhead        # att_features per head = 8 (even)
    d_out = out_feats // nhead          # out_features per head = 16
    dv = d_out // 2                     # value dim per head     = 8

    key = jax.random.PRNGKey(0)
    keys = jax.random.split(key, 20)

    def lin(kw, kb, din, dout):
        w = (jax.random.normal(kw, (din, dout), jnp.float32) * 0.1)
        b = (jax.random.normal(kb, (dout,), jnp.float32) * 0.1)
        return w, b

    params = []
    ki = 0
    for dout in [nhead * d_att, nhead * d_att, nhead * dv,
                 nhead * d_att, nhead * d_att, nhead * dv]:
        w, b = lin(keys[ki], keys[ki + 1], in_feats, dout)
        ki += 2
        params += [w, b]
    params = tuple(params)

    x = jax.random.normal(keys[ki], (N, in_feats), jnp.float32); ki += 1
    fst_graph = jax.random.bernoulli(keys[ki], 0.6, (N, N)).astype(jnp.float32); ki += 1
    sec_graph = jax.random.bernoulli(keys[ki], 0.6, (N, N)).astype(jnp.float32); ki += 1
    # normal_to_conjugate / conjugate_to_normal: per-entry column-index maps.
    n2c = jax.random.randint(keys[ki], (N, N), 0, N, jnp.int32); ki += 1
    c2n = jax.random.randint(keys[ki], (N, N), 0, N, jnp.int32); ki += 1

    out = con_gat_layer(x, params, fst_graph, sec_graph, n2c, c2n,
                        nhead=nhead, att_feats=d_att, dv=dv)
    out = jax.block_until_ready(out)

    ref = reference(x, params, fst_graph, sec_graph, n2c, c2n, nhead, d_att, dv)
    assert out.shape == (N, out_feats), out.shape
    # Kernel uses bf16 MXU operands (f32 accumulation) and an approximate
    # softmax reciprocal, so compare with a bf16-appropriate tolerance.
    max_err = float(jnp.max(jnp.abs(out - ref)))
    assert jnp.allclose(out, ref, rtol=5e-2, atol=5e-2), max_err
    print("KERNEL_OK")
</pallas_src>

<mosaic_0001>
module attributes {stable_mosaic.version = 11 : i64} {
  func.func @_con_gat_kernel(%arg0: i32, %arg1: memref<8x32xbf16, #tpu.memory_space<vmem>>, %arg2: memref<8x16xbf16, #tpu.memory_space<vmem>>, %arg3: memref<8x16xbf16, #tpu.memory_space<vmem>>, %arg4: memref<8x16xbf16, #tpu.memory_space<vmem>>, %arg5: memref<8x16xbf16, #tpu.memory_space<vmem>>, %arg6: memref<8x8xf32, #tpu.memory_space<vmem>>, %arg7: memref<8x8xf32, #tpu.memory_space<vmem>>, %arg8: memref<8x8xi32, #tpu.memory_space<vmem>>, %arg9: memref<8x8xi32, #tpu.memory_space<vmem>>, %arg10: memref<8x32xf32, #tpu.memory_space<vmem>>) attributes {dimension_semantics = [#tpu.dimension_semantics<parallel>], iteration_bounds = array<i64: 1>, scalar_prefetch = 0 : i64, scratch_operands = 0 : i64, tpu.core_type = #tpu.core_type<tc>, window_params = [{transform_indices = @transform_0, window_bounds = array<i64: 8, 32>}, {pipeline_mode = #tpu.pipeline_mode<synchronous>, transform_indices = @transform_1, window_bounds = array<i64: 8, 16>}, {pipeline_mode = #tpu.pipeline_mode<synchronous>, transform_indices = @transform_2, window_bounds = array<i64: 8, 16>}, {pipeline_mode = #tpu.pipeline_mode<synchronous>, transform_indices = @transform_3, window_bounds = array<i64: 8, 16>}, {pipeline_mode = #tpu.pipeline_mode<synchronous>, transform_indices = @transform_4, window_bounds = array<i64: 8, 16>}, {transform_indices = @transform_5, window_bounds = array<i64: 8, 8>}, {transform_indices = @transform_6, window_bounds = array<i64: 8, 8>}, {transform_indices = @transform_7, window_bounds = array<i64: 8, 8>}, {transform_indices = @transform_8, window_bounds = array<i64: 8, 8>}, {transform_indices = @transform_9, window_bounds = array<i64: 8, 32>}]} {
    %c0 = arith.constant 0 : index
    %c0_0 = arith.constant 0 : index
    %0 = vector.load %arg1[%c0, %c0_0] : memref<8x32xbf16, #tpu.memory_space<vmem>>, vector<8x32xbf16>
    %c0_1 = arith.constant 0 : index
    %c0_2 = arith.constant 0 : index
    %1 = vector.load %arg2[%c0_1, %c0_2] : memref<8x16xbf16, #tpu.memory_space<vmem>>, vector<8x16xbf16>
    %c0_3 = arith.constant 0 : index
    %c0_4 = arith.constant 0 : index
    %2 = vector.load %arg3[%c0_3, %c0_4] : memref<8x16xbf16, #tpu.memory_space<vmem>>, vector<8x16xbf16>
    %c0_5 = arith.constant 0 : index
    %c0_6 = arith.constant 0 : index
    %3 = vector.load %arg4[%c0_5, %c0_6] : memref<8x16xbf16, #tpu.memory_space<vmem>>, vector<8x16xbf16>
    %c0_7 = arith.constant 0 : index
    %c0_8 = arith.constant 0 : index
    %4 = vector.load %arg5[%c0_7, %c0_8] : memref<8x16xbf16, #tpu.memory_space<vmem>>, vector<8x16xbf16>
    %c0_9 = arith.constant 0 : index
    %c0_10 = arith.constant 0 : index
    %5 = vector.load %arg6[%c0_9, %c0_10] : memref<8x8xf32, #tpu.memory_space<vmem>>, vector<8x8xf32>
    %c0_11 = arith.constant 0 : index
    %c0_12 = arith.constant 0 : index
    %6 = vector.load %arg7[%c0_11, %c0_12] : memref<8x8xf32, #tpu.memory_space<vmem>>, vector<8x8xf32>
    %c0_13 = arith.constant 0 : index
    %c0_14 = arith.constant 0 : index
    %7 = vector.load %arg8[%c0_13, %c0_14] : memref<8x8xi32, #tpu.memory_space<vmem>>, vector<8x8xi32>
    %c0_15 = arith.constant 0 : index
    %c0_16 = arith.constant 0 : index
    %8 = vector.load %arg9[%c0_15, %c0_16] : memref<8x8xi32, #tpu.memory_space<vmem>>, vector<8x8xi32>
    %9 = vector.extract_strided_slice %0 {offsets = [0, 0], sizes = [8, 8], strides = [1, 1]} : vector<8x32xbf16> to vector<8x8xbf16>
    %10 = vector.extract_strided_slice %1 {offsets = [0, 0], sizes = [8, 8], strides = [1, 1]} : vector<8x16xbf16> to vector<8x8xbf16>
    %cst = arith.constant dense<0.000000e+00> : vector<8x8xf32>
    %11 = tpu.matmul %9, %10, %cst {dimension_numbers = #tpu.dot_dimension_numbers<[1], [1], [0], [0], [0, 0, 1, 0], [], []>} : vector<8x8xbf16>, vector<8x8xbf16>, vector<8x8xf32> -> vector<8x8xf32>
    %12 = vector.extract_strided_slice %0 {offsets = [0, 16], sizes = [8, 8], strides = [1, 1]} : vector<8x32xbf16> to vector<8x8xbf16>
    %13 = vector.extract_strided_slice %2 {offsets = [0, 0], sizes = [8, 8], strides = [1, 1]} : vector<8x16xbf16> to vector<8x8xbf16>
    %cst_17 = arith.constant dense<0.000000e+00> : vector<8x8xf32>
    %14 = tpu.matmul %12, %13, %cst_17 {dimension_numbers = #tpu.dot_dimension_numbers<[1], [1], [0], [0], [0, 0, 1, 0], [], []>} : vector<8x8xbf16>, vector<8x8xbf16>, vector<8x8xf32> -> vector<8x8xf32>
    %15 = vector.extract_strided_slice %0 {offsets = [0, 8], sizes = [8, 8], strides = [1, 1]} : vector<8x32xbf16> to vector<8x8xbf16>
    %16 = vector.extract_strided_slice %1 {offsets = [0, 8], sizes = [8, 8], strides = [1, 1]} : vector<8x16xbf16> to vector<8x8xbf16>
    %cst_18 = arith.constant dense<0.000000e+00> : vector<8x8xf32>
    %17 = tpu.matmul %15, %16, %cst_18 {dimension_numbers = #tpu.dot_dimension_numbers<[1], [1], [0], [0], [0, 0, 1, 0], [], []>} : vector<8x8xbf16>, vector<8x8xbf16>, vector<8x8xf32> -> vector<8x8xf32>
    %18 = vector.extract_strided_slice %0 {offsets = [0, 24], sizes = [8, 8], strides = [1, 1]} : vector<8x32xbf16> to vector<8x8xbf16>
    %19 = vector.extract_strided_slice %2 {offsets = [0, 8], sizes = [8, 8], strides = [1, 1]} : vector<8x16xbf16> to vector<8x8xbf16>
    %cst_19 = arith.constant dense<0.000000e+00> : vector<8x8xf32>
    %20 = tpu.matmul %18, %19, %cst_19 {dimension_numbers = #tpu.dot_dimension_numbers<[1], [1], [0], [0], [0, 0, 1, 0], [], []>} : vector<8x8xbf16>, vector<8x8xbf16>, vector<8x8xf32> -> vector<8x8xf32>
    %21 = tpu.iota {dimensions = array<i32: 2>} : vector<1x1x8xi32>
    %22 = vector.shape_cast %8 : vector<8x8xi32> to vector<8x8x1xi32>
    %23 = vector.broadcast %22 : vector<8x8x1xi32> to vector<8x8x8xi32>
    %24 = vector.broadcast %21 : vector<1x1x8xi32> to vector<8x8x8xi32>
    %25 = arith.cmpi eq, %23, %24 : vector<8x8x8xi32>
    %26 = vector.shape_cast %7 : vector<8x8xi32> to vector<8x8x1xi32>
    %27 = vector.broadcast %26 : vector<8x8x1xi32> to vector<8x8x8xi32>
    %28 = vector.broadcast %21 : vector<1x1x8xi32> to vector<8x8x8xi32>
    %29 = arith.cmpi eq, %27, %28 : vector<8x8x8xi32>
    %30 = vector.shape_cast %14 : vector<8x8xf32> to vector<8x1x8xf32>
    %cst_20 = arith.constant 0.000000e+00 : f32
    %31 = vector.shape_cast %30 : vector<8x1x8xf32> to vector<8x1x8xf32>
    %32 = vector.broadcast %31 : vector<8x1x8xf32> to vector<8x8x8xf32>
    %33 = vector.broadcast %cst_20 : f32 to vector<8x8x8xf32>
    %34 = arith.select %25, %32, %33 : vector<8x8x8xi1>, vector<8x8x8xf32>
    %cst_21 = arith.constant dense<0.000000e+00> : vector<8x8xf32>
    %35 = vector.multi_reduction <add>, %34, %cst_21 [2] : vector<8x8x8xf32> to vector<8x8xf32>
    %36 = vector.shape_cast %11 : vector<8x8xf32> to vector<8x1x8xf32>
    %cst_22 = arith.constant 0.000000e+00 : f32
    %37 = vector.shape_cast %36 : vector<8x1x8xf32> to vector<8x1x8xf32>
    %38 = vector.broadcast %37 : vector<8x1x8xf32> to vector<8x8x8xf32>
    %39 = vector.broadcast %cst_22 : f32 to vector<8x8x8xf32>
    %40 = arith.select %29, %38, %39 : vector<8x8x8xi1>, vector<8x8x8xf32>
    %cst_23 = arith.constant dense<0.000000e+00> : vector<8x8xf32>
    %41 = vector.multi_reduction <add>, %40, %cst_23 [2] : vector<8x8x8xf32> to vector<8x8xf32>
    %42 = vector.shape_cast %20 : vector<8x8xf32> to vector<8x1x8xf32>
    %cst_24 = arith.constant 0.000000e+00 : f32
    %43 = vector.shape_cast %42 : vector<8x1x8xf32> to vector<8x1x8xf32>
    %44 = vector.broadcast %43 : vector<8x1x8xf32> to vector<8x8x8xf32>
    %45 = vector.broadcast %cst_24 : f32 to vector<8x8x8xf32>
    %46 = arith.select %25, %44, %45 : vector<8x8x8xi1>, vector<8x8x8xf32>
    %cst_25 = arith.constant dense<0.000000e+00> : vector<8x8xf32>
    %47 = vector.multi_reduction <add>, %46, %cst_25 [2] : vector<8x8x8xf32> to vector<8x8xf32>
    %48 = vector.shape_cast %17 : vector<8x8xf32> to vector<8x1x8xf32>
    %cst_26 = arith.constant 0.000000e+00 : f32
    %49 = vector.shape_cast %48 : vector<8x1x8xf32> to vector<8x1x8xf32>
    %50 = vector.broadcast %49 : vector<8x1x8xf32> to vector<8x8x8xf32>
    %51 = vector.broadcast %cst_26 : f32 to vector<8x8x8xf32>
    %52 = arith.select %29, %50, %51 : vector<8x8x8xi1>, vector<8x8x8xf32>
    %cst_27 = arith.constant dense<0.000000e+00> : vector<8x8xf32>
    %53 = vector.multi_reduction <add>, %52, %cst_27 [2] : vector<8x8x8xf32> to vector<8x8xf32>
    %54 = arith.addf %11, %35 : vector<8x8xf32>
    %55 = arith.addf %54, %5 : vector<8x8xf32>
    %cst_28 = arith.constant dense<0xFF800000> : vector<8xf32>
    %56 = vector.multi_reduction <maximumf>, %55, %cst_28 [1] : vector<8x8xf32> to vector<8xf32>
    %57 = vector.shape_cast %56 : vector<8xf32> to vector<8x1xf32>
    %58 = vector.broadcast %57 : vector<8x1xf32> to vector<8x8xf32>
    %59 = arith.subf %55, %58 : vector<8x8xf32>
    %60 = math.exp %59 : vector<8x8xf32>
    %cst_29 = arith.constant dense<0.000000e+00> : vector<8xf32>
    %61 = vector.multi_reduction <add>, %60, %cst_29 [1] : vector<8x8xf32> to vector<8xf32>
    %62 = vector.shape_cast %61 : vector<8xf32> to vector<8x1xf32>
    %63 = tpu.reciprocal %62 {approx = true} : vector<8x1xf32> -> vector<8x1xf32>
    %64 = vector.broadcast %63 : vector<8x1xf32> to vector<8x8xf32>
    %65 = arith.mulf %60, %64 : vector<8x8xf32>
    %66 = arith.addf %14, %41 : vector<8x8xf32>
    %67 = arith.addf %66, %6 : vector<8x8xf32>
    %cst_30 = arith.constant dense<0xFF800000> : vector<8xf32>
    %68 = vector.multi_reduction <maximumf>, %67, %cst_30 [1] : vector<8x8xf32> to vector<8xf32>
    %69 = vector.shape_cast %68 : vector<8xf32> to vector<8x1xf32>
    %70 = vector.broadcast %69 : vector<8x1xf32> to vector<8x8xf32>
    %71 = arith.subf %67, %70 : vector<8x8xf32>
    %72 = math.exp %71 : vector<8x8xf32>
    %cst_31 = arith.constant dense<0.000000e+00> : vector<8xf32>
    %73 = vector.multi_reduction <add>, %72, %cst_31 [1] : vector<8x8xf32> to vector<8xf32>
    %74 = vector.shape_cast %73 : vector<8xf32> to vector<8x1xf32>
    %75 = tpu.reciprocal %74 {approx = true} : vector<8x1xf32> -> vector<8x1xf32>
    %76 = vector.broadcast %75 : vector<8x1xf32> to vector<8x8xf32>
    %77 = arith.mulf %72, %76 : vector<8x8xf32>
    %78 = arith.truncf %65 : vector<8x8xf32> to vector<8x8xbf16>
    %79 = vector.extract_strided_slice %3 {offsets = [0, 0], sizes = [8, 8], strides = [1, 1]} : vector<8x16xbf16> to vector<8x8xbf16>
    %cst_32 = arith.constant dense<0.000000e+00> : vector<8x8xf32>
    %80 = tpu.matmul %78, %79, %cst_32 {dimension_numbers = #tpu.dot_dimension_numbers<[1], [0], [0], [1], [0, 0, 1, 1], [], []>} : vector<8x8xbf16>, vector<8x8xbf16>, vector<8x8xf32> -> vector<8x8xf32>
    %81 = arith.truncf %77 : vector<8x8xf32> to vector<8x8xbf16>
    %82 = vector.extract_strided_slice %4 {offsets = [0, 0], sizes = [8, 8], strides = [1, 1]} : vector<8x16xbf16> to vector<8x8xbf16>
    %cst_33 = arith.constant dense<0.000000e+00> : vector<8x8xf32>
    %83 = tpu.matmul %81, %82, %cst_33 {dimension_numbers = #tpu.dot_dimension_numbers<[1], [0], [0], [1], [0, 0, 1, 1], [], []>} : vector<8x8xbf16>, vector<8x8xbf16>, vector<8x8xf32> -> vector<8x8xf32>
    %84 = arith.addf %17, %47 : vector<8x8xf32>
    %85 = arith.addf %84, %5 : vector<8x8xf32>
    %cst_34 = arith.constant dense<0xFF800000> : vector<8xf32>
    %86 = vector.multi_reduction <maximumf>, %85, %cst_34 [1] : vector<8x8xf32> to vector<8xf32>
    %87 = vector.shape_cast %86 : vector<8xf32> to vector<8x1xf32>
    %88 = vector.broadcast %87 : vector<8x1xf32> to vector<8x8xf32>
    %89 = arith.subf %85, %88 : vector<8x8xf32>
    %90 = math.exp %89 : vector<8x8xf32>
    %cst_35 = arith.constant dense<0.000000e+00> : vector<8xf32>
    %91 = vector.multi_reduction <add>, %90, %cst_35 [1] : vector<8x8xf32> to vector<8xf32>
    %92 = vector.shape_cast %91 : vector<8xf32> to vector<8x1xf32>
    %93 = tpu.reciprocal %92 {approx = true} : vector<8x1xf32> -> vector<8x1xf32>
    %94 = vector.broadcast %93 : vector<8x1xf32> to vector<8x8xf32>
    %95 = arith.mulf %90, %94 : vector<8x8xf32>
    %96 = arith.addf %20, %53 : vector<8x8xf32>
    %97 = arith.addf %96, %6 : vector<8x8xf32>
    %cst_36 = arith.constant dense<0xFF800000> : vector<8xf32>
    %98 = vector.multi_reduction <maximumf>, %97, %cst_36 [1] : vector<8x8xf32> to vector<8xf32>
    %99 = vector.shape_cast %98 : vector<8xf32> to vector<8x1xf32>
    %100 = vector.broadcast %99 : vector<8x1xf32> to vector<8x8xf32>
    %101 = arith.subf %97, %100 : vector<8x8xf32>
    %102 = math.exp %101 : vector<8x8xf32>
    %cst_37 = arith.constant dense<0.000000e+00> : vector<8xf32>
    %103 = vector.multi_reduction <add>, %102, %cst_37 [1] : vector<8x8xf32> to vector<8xf32>
    %104 = vector.shape_cast %103 : vector<8xf32> to vector<8x1xf32>
    %105 = tpu.reciprocal %104 {approx = true} : vector<8x1xf32> -> vector<8x1xf32>
    %106 = vector.broadcast %105 : vector<8x1xf32> to vector<8x8xf32>
    %107 = arith.mulf %102, %106 : vector<8x8xf32>
    %108 = arith.truncf %95 : vector<8x8xf32> to vector<8x8xbf16>
    %109 = vector.extract_strided_slice %3 {offsets = [0, 8], sizes = [8, 8], strides = [1, 1]} : vector<8x16xbf16> to vector<8x8xbf16>
    %cst_38 = arith.constant dense<0.000000e+00> : vector<8x8xf32>
    %110 = tpu.matmul %108, %109, %cst_38 {dimension_numbers = #tpu.dot_dimension_numbers<[1], [0], [0], [1], [0, 0, 1, 1], [], []>} : vector<8x8xbf16>, vector<8x8xbf16>, vector<8x8xf32> -> vector<8x8xf32>
    %111 = arith.truncf %107 : vector<8x8xf32> to vector<8x8xbf16>
    %112 = vector.extract_strided_slice %4 {offsets = [0, 8], sizes = [8, 8], strides = [1, 1]} : vector<8x16xbf16> to vector<8x8xbf16>
    %cst_39 = arith.constant dense<0.000000e+00> : vector<8x8xf32>
    %113 = tpu.matmul %111, %112, %cst_39 {dimension_numbers = #tpu.dot_dimension_numbers<[1], [0], [0], [1], [0, 0, 1, 1], [], []>} : vector<8x8xbf16>, vector<8x8xbf16>, vector<8x8xf32> -> vector<8x8xf32>
    %114 = tpu.concatenate %80, %110, %83, %113 in 1 : vector<8x8xf32>, vector<8x8xf32>, vector<8x8xf32>, vector<8x8xf32> -> vector<8x32xf32>
    %c0_40 = arith.constant 0 : index
    %c0_41 = arith.constant 0 : index
    %115 = vector.load %arg10[%c0_40, %c0_41] : memref<8x32xf32, #tpu.memory_space<vmem>>, vector<8x32xf32>
    tpu.vector_store %arg10[%c0_40, %c0_41], %114 {strides = array<i32>} : memref<8x32xf32, #tpu.memory_space<vmem>>, vector<8x32xf32>,
    return
  }
  func.func @transform_0(%arg0: i32) -> (i32, i32) {
    %c0_i32 = arith.constant 0 : i32
    %c0_i32_0 = arith.constant 0 : i32
    return %arg0, %c0_i32 : i32, i32
  }
  func.func @transform_1(%arg0: i32) -> (i32, i32) {
    %c0_i32 = arith.constant 0 : i32
    %c0_i32_0 = arith.constant 0 : i32
    %c0_i32_1 = arith.constant 0 : i32
    return %c0_i32, %c0_i32_0 : i32, i32
  }
  func.func @transform_2(%arg0: i32) -> (i32, i32) {
    %c0_i32 = arith.constant 0 : i32
    %c0_i32_0 = arith.constant 0 : i32
    %c0_i32_1 = arith.constant 0 : i32
    return %c0_i32, %c0_i32_0 : i32, i32
  }
  func.func @transform_3(%arg0: i32) -> (i32, i32) {
    %c0_i32 = arith.constant 0 : i32
    %c0_i32_0 = arith.constant 0 : i32
    %c0_i32_1 = arith.constant 0 : i32
    return %c0_i32, %c0_i32_0 : i32, i32
  }
  func.func @transform_4(%arg0: i32) -> (i32, i32) {
    %c0_i32 = arith.constant 0 : i32
    %c0_i32_0 = arith.constant 0 : i32
    %c0_i32_1 = arith.constant 0 : i32
    return %c0_i32, %c0_i32_0 : i32, i32
  }
  func.func @transform_5(%arg0: i32) -> (i32, i32) {
    %c0_i32 = arith.constant 0 : i32
    %c0_i32_0 = arith.constant 0 : i32
    return %arg0, %c0_i32 : i32, i32
  }
  func.func @transform_6(%arg0: i32) -> (i32, i32) {
    %c0_i32 = arith.constant 0 : i32
    %c0_i32_0 = arith.constant 0 : i32
    return %arg0, %c0_i32 : i32, i32
  }
  func.func @transform_7(%arg0: i32) -> (i32, i32) {
    %c0_i32 = arith.constant 0 : i32
    %c0_i32_0 = arith.constant 0 : i32
    return %arg0, %c0_i32 : i32, i32
  }
  func.func @transform_8(%arg0: i32) -> (i32, i32) {
    %c0_i32 = arith.constant 0 : i32
    %c0_i32_0 = arith.constant 0 : i32
    return %arg0, %c0_i32 : i32, i32
  }
  func.func @transform_9(%arg0: i32) -> (i32, i32) {
    %c0_i32 = arith.constant 0 : i32
    %c0_i32_0 = arith.constant 0 : i32
    return %arg0, %c0_i32 : i32, i32
  }
}

</mosaic_0001>

<llo_original>
// kernel: tpu_custom_call.1
$region0: #{tpu_custom_call.1}
  #allocation0 [shape = 'u32[]', space=smem, size = 0x4, offset = 0x4, fixed_abs, tag = 'smem constant byte address 0x4 - core index']
  #allocation1 [shape = 'u32[144,128]{1,0:T(1,128)}', space=vmem, size = 0x12000, scoped, tag = 'internal scratch']
  %s0 = inlined_call_operand.hbm [shape: bf16[8,32], index: 0, kind: input, shape index: {}]
  %s1 = inlined_call_operand.hbm [shape: bf16[8,16], index: 1, kind: input, shape index: {}]
  %s2 = inlined_call_operand.hbm [shape: bf16[8,16], index: 2, kind: input, shape index: {}]
  %s3 = inlined_call_operand.hbm [shape: bf16[8,16], index: 3, kind: input, shape index: {}]
  %s4 = inlined_call_operand.hbm [shape: bf16[8,16], index: 4, kind: input, shape index: {}]
  %s5 = inlined_call_operand.vmem [shape: f32[8,8], index: 5, kind: input, shape index: {}]
  %s6 = inlined_call_operand.hbm [shape: f32[8,8], index: 6, kind: input, shape index: {}]
  %s7 = inlined_call_operand.hbm [shape: s32[8,8], index: 7, kind: input, shape index: {}]
  %s8 = inlined_call_operand.hbm [shape: s32[8,8], index: 8, kind: input, shape index: {}]
  %s9 = inlined_call_operand.hbm [shape: f32[8,32], index: 9, kind: output, shape index: {}]
  %s10 = sld [smem:[#allocation0]]
  $region78: #{tpu_custom_call.1} parent=0
    _
  %s12 = ssub.s32 1, %s10
  %s13 = scalar_select 0, %s12, %s10
  $region1: #{tpu_custom_call.1} parent=0
    #allocation2 [shape = 'u8[2048]{0}', space=vmem, size = 0x800, scoped, tag = 'input window, operand 0, single buffered']
    #allocation3 [shape = 's32[1]{0}', space=sflag, size = 0x4, scoped, tag = 'scoped memory for tpu_custom_call.1']
    #allocation4 [shape = 's32[1]{0}', space=sflag, size = 0x4, scoped, tag = 'scoped memory for tpu_custom_call.1']
    #allocation5 [shape = 'u8[2048]{0}', space=vmem, size = 0x800, scoped, tag = 'input window, operand 1, single buffered']
    #allocation6 [shape = 's32[1]{0}', space=sflag, size = 0x4, scoped, tag = 'scoped memory for tpu_custom_call.1']
    #allocation7 [shape = 'u8[2048]{0}', space=vmem, size = 0x800, scoped, tag = 'input window, operand 2, single buffered']
    #allocation8 [shape = 'u8[2048]{0}', space=vmem, size = 0x800, scoped, tag = 'input window, operand 3, single buffered']
    #allocation9 [shape = 's32[1]{0}', space=sflag, size = 0x4, scoped, tag = 'scoped memory for tpu_custom_call.1']
    #allocation10 [shape = 'u8[2048]{0}', space=vmem, size = 0x800, scoped, tag = 'input window, operand 4, single buffered']
    #allocation11 [shape = 'u8[4096]{0}', space=vmem, size = 0x1000, scoped, tag = 'input window, operand 6, single buffered']
    #allocation12 [shape = 's32[1]{0}', space=sflag, size = 0x4, scoped, tag = 'scoped memory for tpu_custom_call.1']
    #allocation13 [shape = 'u8[4096]{0}', space=vmem, size = 0x1000, scoped, tag = 'input window, operand 7, single buffered']
    #allocation14 [shape = 'u8[4096]{0}', space=vmem, size = 0x1000, scoped, tag = 'input window, operand 8, single buffered']
    #allocation15 [shape = 's32[1]{0}', space=sflag, size = 0x4, scoped, tag = 'scoped memory for tpu_custom_call.1']
    #allocation16 [shape = 'u8[4096]{0}', space=vmem, size = 0x1000, scoped, tag = 'output window, operand 0, single buffered']
    %14 = vsyncpa [#allocation3], 0
    %15 = vsyncpa [#allocation6], 0
    %16 = vsyncpa [#allocation9], 0
    %17 = vsyncpa [#allocation12], 0
    %18 = vsyncpa [#allocation15], 0
    %19 = vsyncpa [#allocation4], 0
    // Predicated region
    $region2: #{tpu_custom_call.1} parent=1 // pred_check
      _
    $region3: #{tpu_custom_call.1} parent=1 // pred_check_branch
      %21 = sbr.rel (0) target = $region5
    $region4: #{tpu_custom_call.1} parent=1 // pred_region
      %s23 = ssub.s32 64, 64
      %24 = vsyncadd [#allocation3], %s23
      %s26 = sshll.u32 [#allocation2], 4
      %s27 = int_to_ptr.vmem [resolvable:$true] %s26
      %29 = dma.hbm_to_vmem [thread:$0]  %s0, 64, %s27, [#allocation3]
    $region5: #{tpu_custom_call.1} parent=1 // pred_fallthru
      _
    // Predicated region
    $region6: #{tpu_custom_call.1} parent=1 // pred_check
      _
    $region7: #{tpu_custom_call.1} parent=1 // pred_check_branch
      %31 = sbr.rel (0) target = $region9
    $region8: #{tpu_custom_call.1} parent=1 // pred_region
      %s33 = ssub.s32 64, 64
      %34 = vsyncadd [#allocation6], %s33
      %s36 = sshll.u32 [#allocation5], 4
      %s37 = int_to_ptr.vmem [resolvable:$true] %s36
      %39 = dma.hbm_to_vmem [thread:$0]  %s1, 64, %s37, [#allocation6]
    $region9: #{tpu_custom_call.1} parent=1 // pred_fallthru
      _
    // Predicated region
    $region10: #{tpu_custom_call.1} parent=1 // pred_check
      _
    $region11: #{tpu_custom_call.1} parent=1 // pred_check_branch
      %41 = sbr.rel (0) target = $region13
    $region12: #{tpu_custom_call.1} parent=1 // pred_region
      %s43 = ssub.s32 64, 64
      %44 = vsyncadd [#allocation6], %s43
      %s46 = sshll.u32 [#allocation7], 4
      %s47 = int_to_ptr.vmem [resolvable:$true] %s46
      %49 = dma.hbm_to_vmem [thread:$0]  %s2, 64, %s47, [#allocation6]
    $region13: #{tpu_custom_call.1} parent=1 // pred_fallthru
      _
    // Predicated region
    $region14: #{tpu_custom_call.1} parent=1 // pred_check
      _
    $region15: #{tpu_custom_call.1} parent=1 // pred_check_branch
      %51 = sbr.rel (0) target = $region17
    $region16: #{tpu_custom_call.1} parent=1 // pred_region
      %s53 = ssub.s32 64, 64
      %54 = vsyncadd [#allocation9], %s53
      %s56 = sshll.u32 [#allocation8], 4
      %s57 = int_to_ptr.vmem [resolvable:$true] %s56
      %59 = dma.hbm_to_vmem [thread:$0]  %s3, 64, %s57, [#allocation9]
    $region17: #{tpu_custom_call.1} parent=1 // pred_fallthru
      _
    // Predicated region
    $region18: #{tpu_custom_call.1} parent=1 // pred_check
      _
    $region19: #{tpu_custom_call.1} parent=1 // pred_check_branch
      %61 = sbr.rel (0) target = $region21
    $region20: #{tpu_custom_call.1} parent=1 // pred_region
      %s63 = ssub.s32 64, 64
      %64 = vsyncadd [#allocation9], %s63
      %s66 = sshll.u32 [#allocation10], 4
      %s67 = int_to_ptr.vmem [resolvable:$true] %s66
      %69 = dma.hbm_to_vmem [thread:$0]  %s4, 64, %s67, [#allocation9]
    $region21: #{tpu_custom_call.1} parent=1 // pred_fallthru
      _
    // Predicated region
    $region22: #{tpu_custom_call.1} parent=1 // pred_check
      _
    $region23: #{tpu_custom_call.1} parent=1 // pred_check_branch
      %71 = sbr.rel (0) target = $region25
    $region24: #{tpu_custom_call.1} parent=1 // pred_region
      _
    $region25: #{tpu_custom_call.1} parent=1 // pred_fallthru
      _
    // Predicated region
    $region26: #{tpu_custom_call.1} parent=1 // pred_check
      _
    $region27: #{tpu_custom_call.1} parent=1 // pred_check_branch
      %73 = sbr.rel (0) target = $region29
    $region28: #{tpu_custom_call.1} parent=1 // pred_region
      %s75 = ssub.s32 128, 128
      %76 = vsyncadd [#allocation12], %s75
      %s78 = sshll.u32 [#allocation11], 4
      %s79 = int_to_ptr.vmem [resolvable:$true] %s78
      %81 = dma.hbm_to_vmem [thread:$0]  %s6, 128, %s79, [#allocation12]
    $region29: #{tpu_custom_call.1} parent=1 // pred_fallthru
      _
    // Predicated region
    $region30: #{tpu_custom_call.1} parent=1 // pred_check
      _
    $region31: #{tpu_custom_call.1} parent=1 // pred_check_branch
      %83 = sbr.rel (0) target = $region33
    $region32: #{tpu_custom_call.1} parent=1 // pred_region
      %s85 = ssub.s32 128, 128
      %86 = vsyncadd [#allocation12], %s85
      %s88 = sshll.u32 [#allocation13], 4
      %s89 = int_to_ptr.vmem [resolvable:$true] %s88
      %91 = dma.hbm_to_vmem [thread:$0]  %s7, 128, %s89, [#allocation12]
    $region33: #{tpu_custom_call.1} parent=1 // pred_fallthru
      _
    // Predicated region
    $region34: #{tpu_custom_call.1} parent=1 // pred_check
      _
    $region35: #{tpu_custom_call.1} parent=1 // pred_check_branch
      %93 = sbr.rel (0) target = $region37
    $region36: #{tpu_custom_call.1} parent=1 // pred_region
      %s95 = ssub.s32 128, 128
      %96 = vsyncadd [#allocation15], %s95
      %s98 = sshll.u32 [#allocation14], 4
      %s99 = int_to_ptr.vmem [resolvable:$true] %s98
      %101 = dma.hbm_to_vmem [thread:$0]  %s8, 128, %s99, [#allocation15]
    $region37: #{tpu_custom_call.1} parent=1 // pred_fallthru
      _
    // Predicated region
    $region38: #{tpu_custom_call.1} parent=1 // pred_check
      _
    $region39: #{tpu_custom_call.1} parent=1 // pred_check_branch
      %103 = sbr.rel (0) target = $region41
    $region40: #{tpu_custom_call.1} parent=1 // pred_region
      %104 = dma.done [#allocation3], 64
    $region41: #{tpu_custom_call.1} parent=1 // pred_fallthru
      _
    // Predicated region
    $region42: #{tpu_custom_call.1} parent=1 // pred_check
      _
    $region43: #{tpu_custom_call.1} parent=1 // pred_check_branch
      %106 = sbr.rel (0) target = $region45
    $region44: #{tpu_custom_call.1} parent=1 // pred_region
      %107 = dma.done [#allocation6], 64
    $region45: #{tpu_custom_call.1} parent=1 // pred_fallthru
      _
    // Predicated region
    $region46: #{tpu_custom_call.1} parent=1 // pred_check
      _
    $region47: #{tpu_custom_call.1} parent=1 // pred_check_branch
      %109 = sbr.rel (0) target = $region49
    $region48: #{tpu_custom_call.1} parent=1 // pred_region
      %110 = dma.done [#allocation6], 64
    $region49: #{tpu_custom_call.1} parent=1 // pred_fallthru
      _
    // Predicated region
    $region50: #{tpu_custom_call.1} parent=1 // pred_check
      _
    $region51: #{tpu_custom_call.1} parent=1 // pred_check_branch
      %112 = sbr.rel (0) target = $region53
    $region52: #{tpu_custom_call.1} parent=1 // pred_region
      %113 = dma.done [#allocation9], 64
    $region53: #{tpu_custom_call.1} parent=1 // pred_fallthru
      _
    // Predicated region
    $region54: #{tpu_custom_call.1} parent=1 // pred_check
      _
    $region55: #{tpu_custom_call.1} parent=1 // pred_check_branch
      %115 = sbr.rel (0) target = $region57
    $region56: #{tpu_custom_call.1} parent=1 // pred_region
      %116 = dma.done [#allocation9], 64
    $region57: #{tpu_custom_call.1} parent=1 // pred_fallthru
      _
    // Predicated region
    $region58: #{tpu_custom_call.1} parent=1 // pred_check
      _
    $region59: #{tpu_custom_call.1} parent=1 // pred_check_branch
      %118 = sbr.rel (0) target = $region61
    $region60: #{tpu_custom_call.1} parent=1 // pred_region
      %119 = dma.done [#allocation12], 128
    $region61: #{tpu_custom_call.1} parent=1 // pred_fallthru
      _
    // Predicated region
    $region62: #{tpu_custom_call.1} parent=1 // pred_check
      _
    $region63: #{tpu_custom_call.1} parent=1 // pred_check_branch
      %121 = sbr.rel (0) target = $region65
    $region64: #{tpu_custom_call.1} parent=1 // pred_region
      %122 = dma.done [#allocation12], 128
    $region65: #{tpu_custom_call.1} parent=1 // pred_fallthru
      _
    // Predicated region
    $region66: #{tpu_custom_call.1} parent=1 // pred_check
      _
    $region67: #{tpu_custom_call.1} parent=1 // pred_check_branch
      %124 = sbr.rel (0) target = $region69
    $region68: #{tpu_custom_call.1} parent=1 // pred_region
      %125 = dma.done [#allocation15], 128
    $region69: #{tpu_custom_call.1} parent=1 // pred_fallthru
      _
    %v127 = vld [vmem:[#allocation2] sm:$0xf]
    %v128 = vld [vmem:[#allocation5] sm:$0xf]
    %v129 = vld [vmem:[#allocation7] sm:$0xf]
    %v130 = vld [vmem:[#allocation8] sm:$0xf]
    %v131 = vld [vmem:[#allocation10] sm:$0xf]
    %v132 = vld [vmem:[%s5] sm:$0xff]
    %v133 = vld [vmem:[#allocation11] sm:$0xff]
    %v134 = vld [vmem:[#allocation13] sm:$0xff]
    %v135 = vld [vmem:[#allocation14] sm:$0xff]
    %vm136 = vcmask 64512
    %v138 = vsel %vm136, %v127, 0
    %v141 = vsel %vm136, %v128, 0
    %143 = vmatprep.subr.bf16.mxu0 0
    %144 = vmatpush1.bf16.xpose.msra.mxu0 0
    %145 = vmatprep.subr.bf16.mxu0 0
    %146 = vmatpush1.bf16.xpose.msra.mxu0 0
    %147 = vmatprep.subr.bf16.mxu0 0
    %148 = vmatpush1.bf16.xpose.msra.mxu0 0
    %149 = vmatprep.subr.bf16.mxu0 0
    %150 = vmatpush1.bf16.xpose.msra.mxu0 0
    %151 = vmatprep.subr.bf16.mxu0 0
    %152 = vmatpush1.bf16.xpose.msra.mxu0 0
    %153 = vmatprep.subr.bf16.mxu0 0
    %154 = vmatpush1.bf16.xpose.msra.mxu0 0
    %155 = vmatprep.subr.bf16.mxu0 0
    %156 = vmatpush1.bf16.xpose.msra.mxu0 0
    %157 = vmatprep.subr.bf16.mxu0 0
    %158 = vmatpush1.bf16.xpose.msra.mxu0 %v141
    %159 = vmatprep.subr.bf16.mxu0 0
    %160 = vmatpush2.bf16.xpose.msra.mxu0 0
    %161 = vmatprep.subr.bf16.mxu0 0
    %162 = vmatpush2.bf16.xpose.msra.mxu0 0
    %163 = vmatprep.subr.bf16.mxu0 0
    %164 = vmatpush2.bf16.xpose.msra.mxu0 0
    %165 = vmatprep.subr.bf16.mxu0 0
    %166 = vmatpush2.bf16.xpose.msra.mxu0 0
    %167 = vmatprep.subr.bf16.mxu0 0
    %168 = vmatpush2.bf16.xpose.msra.mxu0 0
    %169 = vmatprep.subr.bf16.mxu0 0
    %170 = vmatpush2.bf16.xpose.msra.mxu0 0
    %171 = vmatprep.subr.bf16.mxu0 0
    %172 = vmatpush2.bf16.xpose.msra.mxu0 0
    %173 = vmatprep.subr.bf16.mxu0 0
    %174 = vmatpush2.bf16.xpose.msra.mxu0 0
    %175 = vmatprep.mubr.bf16.mxu0 0
    %176 = vmatmul.mubr.bf16.gmra.mxu0 %v138
    %v177 = vpop.f32.mrf.mxu0
    %v178 = vadd.f32 0.0, %v177
    %v179 = vpop.f32.mrf.mxu0
    %v180 = vpop.f32.mrf.mxu0
    %v181 = vpop.f32.mrf.mxu0
    %182 = vdwg.mxu0
    %v184 = vunpack.c.l.b16 %v127
    %v185 = vpack.c.b16 %v184, %v184
    %186 = vrot.lane.b32.xlu0 %v185, 112
    %v187 = vpop.permute.xlu0 %186
    %v189 = vsel %vm136, %v187, 0
    %v192 = vsel %vm136, %v129, 0
    %194 = vmatprep.subr.bf16.mxu0 0
    %195 = vmatpush1.bf16.xpose.msra.mxu0 0
    %196 = vmatprep.subr.bf16.mxu0 0
    %197 = vmatpush1.bf16.xpose.msra.mxu0 0
    %198 = vmatprep.subr.bf16.mxu0 0
    %199 = vmatpush1.bf16.xpose.msra.mxu0 0
    %200 = vmatprep.subr.bf16.mxu0 0
    %201 = vmatpush1.bf16.xpose.msra.mxu0 0
    %202 = vmatprep.subr.bf16.mxu0 0
    %203 = vmatpush1.bf16.xpose.msra.mxu0 0
    %204 = vmatprep.subr.bf16.mxu0 0
    %205 = vmatpush1.bf16.xpose.msra.mxu0 0
    %206 = vmatprep.subr.bf16.mxu0 0
    %207 = vmatpush1.bf16.xpose.msra.mxu0 0
    %208 = vmatprep.subr.bf16.mxu0 0
    %209 = vmatpush1.bf16.xpose.msra.mxu0 %v192
    %210 = vmatprep.subr.bf16.mxu0 0
    %211 = vmatpush2.bf16.xpose.msra.mxu0 0
    %212 = vmatprep.subr.bf16.mxu0 0
    %213 = vmatpush2.bf16.xpose.msra.mxu0 0
    %214 = vmatprep.subr.bf16.mxu0 0
    %215 = vmatpush2.bf16.xpose.msra.mxu0 0
    %216 = vmatprep.subr.bf16.mxu0 0
    %217 = vmatpush2.bf16.xpose.msra.mxu0 0
    %218 = vmatprep.subr.bf16.mxu0 0
    %219 = vmatpush2.bf16.xpose.msra.mxu0 0
    %220 = vmatprep.subr.bf16.mxu0 0
    %221 = vmatpush2.bf16.xpose.msra.mxu0 0
    %222 = vmatprep.subr.bf16.mxu0 0
    %223 = vmatpush2.bf16.xpose.msra.mxu0 0
    %224 = vmatprep.subr.bf16.mxu0 0
    %225 = vmatpush2.bf16.xpose.msra.mxu0 0
    %226 = vmatprep.mubr.bf16.mxu0 0
    %227 = vmatmul.mubr.bf16.gmra.mxu0 %v189
    %v228 = vpop.f32.mrf.mxu0
    %v229 = vadd.f32 0.0, %v228
    %v230 = vpop.f32.mrf.mxu0
    %v231 = vpop.f32.mrf.mxu0
    %v232 = vpop.f32.mrf.mxu0
    %233 = vdwg.mxu0
    %234 = vrot.lane.b32.xlu0 %v185, 120
    %v235 = vpop.permute.xlu0 %234
    %v237 = vunpack.c.l.b16 %v128
    %v238 = vpack.c.b16 %v237, %v237
    %239 = vrot.lane.b32.xlu0 %v238, 120
    %v240 = vpop.permute.xlu0 %239
    %v242 = vsel %vm136, %v235, 0
    %v245 = vsel %vm136, %v240, 0
    %247 = vmatprep.subr.bf16.mxu0 0
    %248 = vmatpush1.bf16.xpose.msra.mxu0 0
    %249 = vmatprep.subr.bf16.mxu0 0
    %250 = vmatpush1.bf16.xpose.msra.mxu0 0
    %251 = vmatprep.subr.bf16.mxu0 0
    %252 = vmatpush1.bf16.xpose.msra.mxu0 0
    %253 = vmatprep.subr.bf16.mxu0 0
    %254 = vmatpush1.bf16.xpose.msra.mxu0 0
    %255 = vmatprep.subr.bf16.mxu0 0
    %256 = vmatpush1.bf16.xpose.msra.mxu0 0
    %257 = vmatprep.subr.bf16.mxu0 0
    %258 = vmatpush1.bf16.xpose.msra.mxu0 0
    %259 = vmatprep.subr.bf16.mxu0 0
    %260 = vmatpush1.bf16.xpose.msra.mxu0 0
    %261 = vmatprep.subr.bf16.mxu0 0
    %262 = vmatpush1.bf16.xpose.msra.mxu0 %v245
    %263 = vmatprep.subr.bf16.mxu0 0
    %264 = vmatpush2.bf16.xpose.msra.mxu0 0
    %265 = vmatprep.subr.bf16.mxu0 0
    %266 = vmatpush2.bf16.xpose.msra.mxu0 0
    %267 = vmatprep.subr.bf16.mxu0 0
    %268 = vmatpush2.bf16.xpose.msra.mxu0 0
    %269 = vmatprep.subr.bf16.mxu0 0
    %270 = vmatpush2.bf16.xpose.msra.mxu0 0
    %271 = vmatprep.subr.bf16.mxu0 0
    %272 = vmatpush2.bf16.xpose.msra.mxu0 0
    %273 = vmatprep.subr.bf16.mxu0 0
    %274 = vmatpush2.bf16.xpose.msra.mxu0 0
    %275 = vmatprep.subr.bf16.mxu0 0
    %276 = vmatpush2.bf16.xpose.msra.mxu0 0
    %277 = vmatprep.subr.bf16.mxu0 0
    %278 = vmatpush2.bf16.xpose.msra.mxu0 0
    %279 = vmatprep.mubr.bf16.mxu0 0
    %280 = vmatmul.mubr.bf16.gmra.mxu0 %v242
    %v281 = vpop.f32.mrf.mxu0
    %v282 = vadd.f32 0.0, %v281
    %v283 = vpop.f32.mrf.mxu0
    %v284 = vpop.f32.mrf.mxu0
    %v285 = vpop.f32.mrf.mxu0
    %286 = vdwg.mxu0
    %287 = vrot.lane.b32.xlu0 %v185, 104
    %v288 = vpop.permute.xlu0 %287
    %v290 = vunpack.c.l.b16 %v129
    %v291 = vpack.c.b16 %v290, %v290
    %292 = vrot.lane.b32.xlu0 %v291, 120
    %v293 = vpop.permute.xlu0 %292
    %v295 = vsel %vm136, %v288, 0
    %v298 = vsel %vm136, %v293, 0
    %300 = vmatprep.subr.bf16.mxu0 0
    %301 = vmatpush1.bf16.xpose.msra.mxu0 0
    %302 = vmatprep.subr.bf16.mxu0 0
    %303 = vmatpush1.bf16.xpose.msra.mxu0 0
    %304 = vmatprep.subr.bf16.mxu0 0
    %305 = vmatpush1.bf16.xpose.msra.mxu0 0
    %306 = vmatprep.subr.bf16.mxu0 0
    %307 = vmatpush1.bf16.xpose.msra.mxu0 0
    %308 = vmatprep.subr.bf16.mxu0 0
    %309 = vmatpush1.bf16.xpose.msra.mxu0 0
    %310 = vmatprep.subr.bf16.mxu0 0
    %311 = vmatpush1.bf16.xpose.msra.mxu0 0
    %312 = vmatprep.subr.bf16.mxu0 0
    %313 = vmatpush1.bf16.xpose.msra.mxu0 0
    %314 = vmatprep.subr.bf16.mxu0 0
    %315 = vmatpush1.bf16.xpose.msra.mxu0 %v298
    %316 = vmatprep.subr.bf16.mxu0 0
    %317 = vmatpush2.bf16.xpose.msra.mxu0 0
    %318 = vmatprep.subr.bf16.mxu0 0
    %319 = vmatpush2.bf16.xpose.msra.mxu0 0
    %320 = vmatprep.subr.bf16.mxu0 0
    %321 = vmatpush2.bf16.xpose.msra.mxu0 0
    %322 = vmatprep.subr.bf16.mxu0 0
    %323 = vmatpush2.bf16.xpose.msra.mxu0 0
    %324 = vmatprep.subr.bf16.mxu0 0
    %325 = vmatpush2.bf16.xpose.msra.mxu0 0
    %326 = vmatprep.subr.bf16.mxu0 0
    %327 = vmatpush2.bf16.xpose.msra.mxu0 0
    %328 = vmatprep.subr.bf16.mxu0 0
    %329 = vmatpush2.bf16.xpose.msra.mxu0 0
    %330 = vmatprep.subr.bf16.mxu0 0
    %331 = vmatpush2.bf16.xpose.msra.mxu0 0
    %332 = vmatprep.mubr.bf16.mxu0 0
    %333 = vmatmul.mubr.bf16.gmra.mxu0 %v295
    %v334 = vpop.f32.mrf.mxu0
    %v335 = vadd.f32 0.0, %v334
    %v336 = vpop.f32.mrf.mxu0
    %v337 = vpop.f32.mrf.mxu0
    %v338 = vpop.f32.mrf.mxu0
    %339 = vdwg.mxu0
    %v340 = vlaneseq
    %v341 = vand.u32 %v340, 127
    %v342 = vlaneseq
    %v343 = vshrl.u32 %v342, 7
    %v344 = vsub.s32 0, %v343
    %v345 = vrot.slane %v135, %v344
    %347 = vbcast.lane.b32.xlu0 %v345, 256
    %v348 = vpop.permute.xlu0 %347
    %v349 = vlaneseq
    %v350 = vshrl.u32 %v349, 7
    %v351 = vsub.s32 1, %v350
    %v352 = vrot.slane %v135, %v351
    %354 = vbcast.lane.b32.xlu0 %v352, 256
    %v355 = vpop.permute.xlu0 %354
    %v356 = vlaneseq
    %v357 = vshrl.u32 %v356, 7
    %v358 = vsub.s32 2, %v357
    %v359 = vrot.slane %v135, %v358
    %361 = vbcast.lane.b32.xlu0 %v359, 256
    %v362 = vpop.permute.xlu0 %361
    %v363 = vlaneseq
    %v364 = vshrl.u32 %v363, 7
    %v365 = vsub.s32 3, %v364
    %v366 = vrot.slane %v135, %v365
    %368 = vbcast.lane.b32.xlu0 %v366, 256
    %v369 = vpop.permute.xlu0 %368
    %v370 = vlaneseq
    %v371 = vshrl.u32 %v370, 7
    %v372 = vsub.s32 4, %v371
    %v373 = vrot.slane %v135, %v372
    %375 = vbcast.lane.b32.xlu0 %v373, 256
    %v376 = vpop.permute.xlu0 %375
    %v377 = vlaneseq
    %v378 = vshrl.u32 %v377, 7
    %v379 = vsub.s32 5, %v378
    %v380 = vrot.slane %v135, %v379
    %382 = vbcast.lane.b32.xlu0 %v380, 256
    %v383 = vpop.permute.xlu0 %382
    %v384 = vlaneseq
    %v385 = vshrl.u32 %v384, 7
    %v386 = vsub.s32 6, %v385
    %v387 = vrot.slane %v135, %v386
    %389 = vbcast.lane.b32.xlu0 %v387, 256
    %v390 = vpop.permute.xlu0 %389
    %v391 = vlaneseq
    %v392 = vshrl.u32 %v391, 7
    %v393 = vsub.s32 7, %v392
    %v394 = vrot.slane %v135, %v393
    %396 = vbcast.lane.b32.xlu0 %v394, 256
    %v397 = vpop.permute.xlu0 %396
    %vm398 = vcmp.eq.s32.totalorder %v348, %v341
    %vm399 = vcmp.eq.s32.totalorder %v355, %v341
    %vm400 = vcmp.eq.s32.totalorder %v362, %v341
    %vm401 = vcmp.eq.s32.totalorder %v369, %v341
    %vm402 = vcmp.eq.s32.totalorder %v376, %v341
    %vm403 = vcmp.eq.s32.totalorder %v383, %v341
    %vm404 = vcmp.eq.s32.totalorder %v390, %v341
    %vm405 = vcmp.eq.s32.totalorder %v397, %v341
    %v406 = vlaneseq
    %v407 = vshrl.u32 %v406, 7
    %v408 = vsub.s32 0, %v407
    %v409 = vrot.slane %v134, %v408
    %411 = vbcast.lane.b32.xlu0 %v409, 256
    %v412 = vpop.permute.xlu0 %411
    %v413 = vlaneseq
    %v414 = vshrl.u32 %v413, 7
    %v415 = vsub.s32 1, %v414
    %v416 = vrot.slane %v134, %v415
    %418 = vbcast.lane.b32.xlu0 %v416, 256
    %v419 = vpop.permute.xlu0 %418
    %v420 = vlaneseq
    %v421 = vshrl.u32 %v420, 7
    %v422 = vsub.s32 2, %v421
    %v423 = vrot.slane %v134, %v422
    %425 = vbcast.lane.b32.xlu0 %v423, 256
    %v426 = vpop.permute.xlu0 %425
    %v427 = vlaneseq
    %v428 = vshrl.u32 %v427, 7
    %v429 = vsub.s32 3, %v428
    %v430 = vrot.slane %v134, %v429
    %432 = vbcast.lane.b32.xlu0 %v430, 256
    %v433 = vpop.permute.xlu0 %432
    %v434 = vlaneseq
    %v435 = vshrl.u32 %v434, 7
    %v436 = vsub.s32 4, %v435
    %v437 = vrot.slane %v134, %v436
    %439 = vbcast.lane.b32.xlu0 %v437, 256
    %v440 = vpop.permute.xlu0 %439
    %v441 = vlaneseq
    %v442 = vshrl.u32 %v441, 7
    %v443 = vsub.s32 5, %v442
    %v444 = vrot.slane %v134, %v443
    %446 = vbcast.lane.b32.xlu0 %v444, 256
    %v447 = vpop.permute.xlu0 %446
    %v448 = vlaneseq
    %v449 = vshrl.u32 %v448, 7
    %v450 = vsub.s32 6, %v449
    %v451 = vrot.slane %v134, %v450
    %453 = vbcast.lane.b32.xlu0 %v451, 256
    %v454 = vpop.permute.xlu0 %453
    %v455 = vlaneseq
    %v456 = vshrl.u32 %v455, 7
    %v457 = vsub.s32 7, %v456
    %v458 = vrot.slane %v134, %v457
    %460 = vbcast.lane.b32.xlu0 %v458, 256
    %v461 = vpop.permute.xlu0 %460
    %vm462 = vcmp.eq.s32.totalorder %v412, %v341
    %vm463 = vcmp.eq.s32.totalorder %v419, %v341
    %vm464 = vcmp.eq.s32.totalorder %v426, %v341
    %vm465 = vcmp.eq.s32.totalorder %v433, %v341
    %vm466 = vcmp.eq.s32.totalorder %v440, %v341
    %vm467 = vcmp.eq.s32.totalorder %v447, %v341
    %vm468 = vcmp.eq.s32.totalorder %v454, %v341
    %vm469 = vcmp.eq.s32.totalorder %v461, %v341
    %v471 = vcombine.high %v229, %v229
    %v473 = vunpack.c.l.s4 1966171168
    %v474 = vunpack.c.0.s8 %v473
    %v475 = vlaneseq
    %v476 = vshrl.u32 %v475, 7
    %v477 = vsub.s32 %v474, %v476
    %v478 = vrot.slane %v229, %v477
    %v480 = vunpack.c.l.s4 1966171168
    %v481 = vunpack.c.0.s8 %v480
    %v482 = vlaneseq
    %v483 = vshrl.u32 %v482, 7
    %v484 = vsub.s32 %v481, %v483
    %v485 = vrot.slane %v471, %v484
    %v486 = vcombine.high %v478, %v478
    %v487 = vcombine.high %v485, %v485
    %v489 = vunpack.c.l.s4 1966171168
    %v490 = vunpack.c.0.s8 %v489
    %v491 = vlaneseq
    %v492 = vshrl.u32 %v491, 7
    %v493 = vsub.s32 %v490, %v492
    %v494 = vrot.slane %v478, %v493
    %v496 = vunpack.c.l.s4 1966171168
    %v497 = vunpack.c.0.s8 %v496
    %v498 = vlaneseq
    %v499 = vshrl.u32 %v498, 7
    %v500 = vsub.s32 %v497, %v499
    %v501 = vrot.slane %v485, %v500
    %v503 = vunpack.c.l.s4 1966171168
    %v504 = vunpack.c.0.s8 %v503
    %v505 = vlaneseq
    %v506 = vshrl.u32 %v505, 7
    %v507 = vsub.s32 %v504, %v506
    %v508 = vrot.slane %v486, %v507
    %v510 = vunpack.c.l.s4 1966171168
    %v511 = vunpack.c.0.s8 %v510
    %v512 = vlaneseq
    %v513 = vshrl.u32 %v512, 7
    %v514 = vsub.s32 %v511, %v513
    %v515 = vrot.slane %v487, %v514
    %v516 = vcombine.high %v494, %v494
    %v517 = vcombine.high %v501, %v501
    %v518 = vcombine.high %v508, %v508
    %v519 = vcombine.high %v515, %v515
    %v520 = vlaneseq
    %v521 = vshrl.u32 %v520, 7
    %v522 = vsub.s32 0, %v521
    %v523 = vrot.slane %v494, %v522
    %v524 = vlaneseq
    %v525 = vshrl.u32 %v524, 7
    %v526 = vsub.s32 0, %v525
    %v527 = vrot.slane %v508, %v526
    %v528 = vlaneseq
    %v529 = vshrl.u32 %v528, 7
    %v530 = vsub.s32 0, %v529
    %v531 = vrot.slane %v516, %v530
    %v532 = vlaneseq
    %v533 = vshrl.u32 %v532, 7
    %v534 = vsub.s32 0, %v533
    %v535 = vrot.slane %v518, %v534
    %v536 = vlaneseq
    %v537 = vshrl.u32 %v536, 7
    %v538 = vsub.s32 0, %v537
    %v539 = vrot.slane %v501, %v538
    %v540 = vlaneseq
    %v541 = vshrl.u32 %v540, 7
    %v542 = vsub.s32 0, %v541
    %v543 = vrot.slane %v515, %v542
    %v544 = vlaneseq
    %v545 = vshrl.u32 %v544, 7
    %v546 = vsub.s32 0, %v545
    %v547 = vrot.slane %v517, %v546
    %v548 = vlaneseq
    %v549 = vshrl.u32 %v548, 7
    %v550 = vsub.s32 0, %v549
    %v551 = vrot.slane %v519, %v550
    %v560 = vsel %vm398, %v523, 0.0
    %v561 = vsel %vm399, %v527, 0.0
    %v562 = vsel %vm400, %v531, 0.0
    %v563 = vsel %vm401, %v535, 0.0
    %v564 = vsel %vm402, %v539, 0.0
    %v565 = vsel %vm403, %v543, 0.0
    %v566 = vsel %vm404, %v547, 0.0
    %v567 = vsel %vm405, %v551, 0.0
    %v568 = vsel %vm136, %v560, 0.0
    %569 = vadd.xlane.f32.xlu0 %v568
    %v570 = vpop.xlane.xlu0 %569
    %v571 = vsel %vm136, %v561, 0.0
    %572 = vadd.xlane.f32.xlu0 %v571
    %v573 = vpop.xlane.xlu0 %572
    %v574 = vsel %vm136, %v562, 0.0
    %575 = vadd.xlane.f32.xlu0 %v574
    %v576 = vpop.xlane.xlu0 %575
    %v577 = vsel %vm136, %v563, 0.0
    %578 = vadd.xlane.f32.xlu0 %v577
    %v579 = vpop.xlane.xlu0 %578
    %v580 = vsel %vm136, %v564, 0.0
    %581 = vadd.xlane.f32.xlu0 %v580
    %v582 = vpop.xlane.xlu0 %581
    %v583 = vsel %vm136, %v565, 0.0
    %584 = vadd.xlane.f32.xlu0 %v583
    %v585 = vpop.xlane.xlu0 %584
    %v586 = vsel %vm136, %v566, 0.0
    %587 = vadd.xlane.f32.xlu0 %v586
    %v588 = vpop.xlane.xlu0 %587
    %v589 = vsel %vm136, %v567, 0.0
    %590 = vadd.xlane.f32.xlu0 %v589
    %v591 = vpop.xlane.xlu0 %590
    %v593 = vcombine.high %v178, %v178
    %v595 = vunpack.c.l.s4 1966171168
    %v596 = vunpack.c.0.s8 %v595
    %v597 = vlaneseq
    %v598 = vshrl.u32 %v597, 7
    %v599 = vsub.s32 %v596, %v598
    %v600 = vrot.slane %v178, %v599
    %v602 = vunpack.c.l.s4 1966171168
    %v603 = vunpack.c.0.s8 %v602
    %v604 = vlaneseq
    %v605 = vshrl.u32 %v604, 7
    %v606 = vsub.s32 %v603, %v605
    %v607 = vrot.slane %v593, %v606
    %v608 = vcombine.high %v600, %v600
    %v609 = vcombine.high %v607, %v607
    %v611 = vunpack.c.l.s4 1966171168
    %v612 = vunpack.c.0.s8 %v611
    %v613 = vlaneseq
    %v614 = vshrl.u32 %v613, 7
    %v615 = vsub.s32 %v612, %v614
    %v616 = vrot.slane %v600, %v615
    %v618 = vunpack.c.l.s4 1966171168
    %v619 = vunpack.c.0.s8 %v618
    %v620 = vlaneseq
    %v621 = vshrl.u32 %v620, 7
    %v622 = vsub.s32 %v619, %v621
    %v623 = vrot.slane %v607, %v622
    %v625 = vunpack.c.l.s4 1966171168
    %v626 = vunpack.c.0.s8 %v625
    %v627 = vlaneseq
    %v628 = vshrl.u32 %v627, 7
    %v629 = vsub.s32 %v626, %v628
    %v630 = vrot.slane %v608, %v629
    %v632 = vunpack.c.l.s4 1966171168
    %v633 = vunpack.c.0.s8 %v632
    %v634 = vlaneseq
    %v635 = vshrl.u32 %v634, 7
    %v636 = vsub.s32 %v633, %v635
    %v637 = vrot.slane %v609, %v636
    %v638 = vcombine.high %v616, %v616
    %v639 = vcombine.high %v623, %v623
    %v640 = vcombine.high %v630, %v630
    %v641 = vcombine.high %v637, %v637
    %v642 = vlaneseq
    %v643 = vshrl.u32 %v642, 7
    %v644 = vsub.s32 0, %v643
    %v645 = vrot.slane %v616, %v644
    %v646 = vlaneseq
    %v647 = vshrl.u32 %v646, 7
    %v648 = vsub.s32 0, %v647
    %v649 = vrot.slane %v630, %v648
    %v650 = vlaneseq
    %v651 = vshrl.u32 %v650, 7
    %v652 = vsub.s32 0, %v651
    %v653 = vrot.slane %v638, %v652
    %v654 = vlaneseq
    %v655 = vshrl.u32 %v654, 7
    %v656 = vsub.s32 0, %v655
    %v657 = vrot.slane %v640, %v656
    %v658 = vlaneseq
    %v659 = vshrl.u32 %v658, 7
    %v660 = vsub.s32 0, %v659
    %v661 = vrot.slane %v623, %v660
    %v662 = vlaneseq
    %v663 = vshrl.u32 %v662, 7
    %v664 = vsub.s32 0, %v663
    %v665 = vrot.slane %v637, %v664
    %v666 = vlaneseq
    %v667 = vshrl.u32 %v666, 7
    %v668 = vsub.s32 0, %v667
    %v669 = vrot.slane %v639, %v668
    %v670 = vlaneseq
    %v671 = vshrl.u32 %v670, 7
    %v672 = vsub.s32 0, %v671
    %v673 = vrot.slane %v641, %v672
    %v682 = vsel %vm462, %v645, 0.0
    %v683 = vsel %vm463, %v649, 0.0
    %v684 = vsel %vm464, %v653, 0.0
    %v685 = vsel %vm465, %v657, 0.0
    %v686 = vsel %vm466, %v661, 0.0
    %v687 = vsel %vm467, %v665, 0.0
    %v688 = vsel %vm468, %v669, 0.0
    %v689 = vsel %vm469, %v673, 0.0
    %v690 = vsel %vm136, %v682, 0.0
    %691 = vadd.xlane.f32.xlu0 %v690
    %v692 = vpop.xlane.xlu0 %691
    %v693 = vsel %vm136, %v683, 0.0
    %694 = vadd.xlane.f32.xlu0 %v693
    %v695 = vpop.xlane.xlu0 %694
    %v696 = vsel %vm136, %v684, 0.0
    %697 = vadd.xlane.f32.xlu0 %v696
    %v698 = vpop.xlane.xlu0 %697
    %v699 = vsel %vm136, %v685, 0.0
    %700 = vadd.xlane.f32.xlu0 %v699
    %v701 = vpop.xlane.xlu0 %700
    %v702 = vsel %vm136, %v686, 0.0
    %703 = vadd.xlane.f32.xlu0 %v702
    %v704 = vpop.xlane.xlu0 %703
    %v705 = vsel %vm136, %v687, 0.0
    %706 = vadd.xlane.f32.xlu0 %v705
    %v707 = vpop.xlane.xlu0 %706
    %v708 = vsel %vm136, %v688, 0.0
    %709 = vadd.xlane.f32.xlu0 %v708
    %v710 = vpop.xlane.xlu0 %709
    %v711 = vsel %vm136, %v689, 0.0
    %712 = vadd.xlane.f32.xlu0 %v711
    %v713 = vpop.xlane.xlu0 %712
    %v715 = vcombine.high %v335, %v335
    %v717 = vunpack.c.l.s4 1966171168
    %v718 = vunpack.c.0.s8 %v717
    %v719 = vlaneseq
    %v720 = vshrl.u32 %v719, 7
    %v721 = vsub.s32 %v718, %v720
    %v722 = vrot.slane %v335, %v721
    %v724 = vunpack.c.l.s4 1966171168
    %v725 = vunpack.c.0.s8 %v724
    %v726 = vlaneseq
    %v727 = vshrl.u32 %v726, 7
    %v728 = vsub.s32 %v725, %v727
    %v729 = vrot.slane %v715, %v728
    %v730 = vcombine.high %v722, %v722
    %v731 = vcombine.high %v729, %v729
    %v733 = vunpack.c.l.s4 1966171168
    %v734 = vunpack.c.0.s8 %v733
    %v735 = vlaneseq
    %v736 = vshrl.u32 %v735, 7
    %v737 = vsub.s32 %v734, %v736
    %v738 = vrot.slane %v722, %v737
    %v740 = vunpack.c.l.s4 1966171168
    %v741 = vunpack.c.0.s8 %v740
    %v742 = vlaneseq
    %v743 = vshrl.u32 %v742, 7
    %v744 = vsub.s32 %v741, %v743
    %v745 = vrot.slane %v729, %v744
    %v747 = vunpack.c.l.s4 1966171168
    %v748 = vunpack.c.0.s8 %v747
    %v749 = vlaneseq
    %v750 = vshrl.u32 %v749, 7
    %v751 = vsub.s32 %v748, %v750
    %v752 = vrot.slane %v730, %v751
    %v754 = vunpack.c.l.s4 1966171168
    %v755 = vunpack.c.0.s8 %v754
    %v756 = vlaneseq
    %v757 = vshrl.u32 %v756, 7
    %v758 = vsub.s32 %v755, %v757
    %v759 = vrot.slane %v731, %v758
    %v760 = vcombine.high %v738, %v738
    %v761 = vcombine.high %v745, %v745
    %v762 = vcombine.high %v752, %v752
    %v763 = vcombine.high %v759, %v759
    %v764 = vlaneseq
    %v765 = vshrl.u32 %v764, 7
    %v766 = vsub.s32 0, %v765
    %v767 = vrot.slane %v738, %v766
    %v768 = vlaneseq
    %v769 = vshrl.u32 %v768, 7
    %v770 = vsub.s32 0, %v769
    %v771 = vrot.slane %v752, %v770
    %v772 = vlaneseq
    %v773 = vshrl.u32 %v772, 7
    %v774 = vsub.s32 0, %v773
    %v775 = vrot.slane %v760, %v774
    %v776 = vlaneseq
    %v777 = vshrl.u32 %v776, 7
    %v778 = vsub.s32 0, %v777
    %v779 = vrot.slane %v762, %v778
    %v780 = vlaneseq
    %v781 = vshrl.u32 %v780, 7
    %v782 = vsub.s32 0, %v781
    %v783 = vrot.slane %v745, %v782
    %v784 = vlaneseq
    %v785 = vshrl.u32 %v784, 7
    %v786 = vsub.s32 0, %v785
    %v787 = vrot.slane %v759, %v786
    %v788 = vlaneseq
    %v789 = vshrl.u32 %v788, 7
    %v790 = vsub.s32 0, %v789
    %v791 = vrot.slane %v761, %v790
    %v792 = vlaneseq
    %v793 = vshrl.u32 %v792, 7
    %v794 = vsub.s32 0, %v793
    %v795 = vrot.slane %v763, %v794
    %v804 = vsel %vm398, %v767, 0.0
    %v805 = vsel %vm399, %v771, 0.0
    %v806 = vsel %vm400, %v775, 0.0
    %v807 = vsel %vm401, %v779, 0.0
    %v808 = vsel %vm402, %v783, 0.0
    %v809 = vsel %vm403, %v787, 0.0
    %v810 = vsel %vm404, %v791, 0.0
    %v811 = vsel %vm405, %v795, 0.0
    %v812 = vsel %vm136, %v804, 0.0
    %813 = vadd.xlane.f32.xlu0 %v812
    %v814 = vpop.xlane.xlu0 %813
    %v815 = vsel %vm136, %v805, 0.0
    %816 = vadd.xlane.f32.xlu0 %v815
    %v817 = vpop.xlane.xlu0 %816
    %v818 = vsel %vm136, %v806, 0.0
    %819 = vadd.xlane.f32.xlu0 %v818
    %v820 = vpop.xlane.xlu0 %819
    %v821 = vsel %vm136, %v807, 0.0
    %822 = vadd.xlane.f32.xlu0 %v821
    %v823 = vpop.xlane.xlu0 %822
    %v824 = vsel %vm136, %v808, 0.0
    %825 = vadd.xlane.f32.xlu0 %v824
    %v826 = vpop.xlane.xlu0 %825
    %v827 = vsel %vm136, %v809, 0.0
    %828 = vadd.xlane.f32.xlu0 %v827
    %v829 = vpop.xlane.xlu0 %828
    %v830 = vsel %vm136, %v810, 0.0
    %831 = vadd.xlane.f32.xlu0 %v830
    %v832 = vpop.xlane.xlu0 %831
    %v833 = vsel %vm136, %v811, 0.0
    %834 = vadd.xlane.f32.xlu0 %v833
    %v835 = vpop.xlane.xlu0 %834
    %v837 = vcombine.high %v282, %v282
    %v839 = vunpack.c.l.s4 1966171168
    %v840 = vunpack.c.0.s8 %v839
    %v841 = vlaneseq
    %v842 = vshrl.u32 %v841, 7
    %v843 = vsub.s32 %v840, %v842
    %v844 = vrot.slane %v282, %v843
    %v846 = vunpack.c.l.s4 1966171168
    %v847 = vunpack.c.0.s8 %v846
    %v848 = vlaneseq
    %v849 = vshrl.u32 %v848, 7
    %v850 = vsub.s32 %v847, %v849
    %v851 = vrot.slane %v837, %v850
    %v852 = vcombine.high %v844, %v844
    %v853 = vcombine.high %v851, %v851
    %v855 = vunpack.c.l.s4 1966171168
    %v856 = vunpack.c.0.s8 %v855
    %v857 = vlaneseq
    %v858 = vshrl.u32 %v857, 7
    %v859 = vsub.s32 %v856, %v858
    %v860 = vrot.slane %v844, %v859
    %v862 = vunpack.c.l.s4 1966171168
    %v863 = vunpack.c.0.s8 %v862
    %v864 = vlaneseq
    %v865 = vshrl.u32 %v864, 7
    %v866 = vsub.s32 %v863, %v865
    %v867 = vrot.slane %v851, %v866
    %v869 = vunpack.c.l.s4 1966171168
    %v870 = vunpack.c.0.s8 %v869
    %v871 = vlaneseq
    %v872 = vshrl.u32 %v871, 7
    %v873 = vsub.s32 %v870, %v872
    %v874 = vrot.slane %v852, %v873
    %v876 = vunpack.c.l.s4 1966171168
    %v877 = vunpack.c.0.s8 %v876
    %v878 = vlaneseq
    %v879 = vshrl.u32 %v878, 7
    %v880 = vsub.s32 %v877, %v879
    %v881 = vrot.slane %v853, %v880
    %v882 = vcombine.high %v860, %v860
    %v883 = vcombine.high %v867, %v867
    %v884 = vcombine.high %v874, %v874
    %v885 = vcombine.high %v881, %v881
    %v886 = vlaneseq
    %v887 = vshrl.u32 %v886, 7
    %v888 = vsub.s32 0, %v887
    %v889 = vrot.slane %v860, %v888
    %v890 = vlaneseq
    %v891 = vshrl.u32 %v890, 7
    %v892 = vsub.s32 0, %v891
    %v893 = vrot.slane %v874, %v892
    %v894 = vlaneseq
    %v895 = vshrl.u32 %v894, 7
    %v896 = vsub.s32 0, %v895
    %v897 = vrot.slane %v882, %v896
    %v898 = vlaneseq
    %v899 = vshrl.u32 %v898, 7
    %v900 = vsub.s32 0, %v899
    %v901 = vrot.slane %v884, %v900
    %v902 = vlaneseq
    %v903 = vshrl.u32 %v902, 7
    %v904 = vsub.s32 0, %v903
    %v905 = vrot.slane %v867, %v904
    %v906 = vlaneseq
    %v907 = vshrl.u32 %v906, 7
    %v908 = vsub.s32 0, %v907
    %v909 = vrot.slane %v881, %v908
    %v910 = vlaneseq
    %v911 = vshrl.u32 %v910, 7
    %v912 = vsub.s32 0, %v911
    %v913 = vrot.slane %v883, %v912
    %v914 = vlaneseq
    %v915 = vshrl.u32 %v914, 7
    %v916 = vsub.s32 0, %v915
    %v917 = vrot.slane %v885, %v916
    %v926 = vsel %vm462, %v889, 0.0
    %v927 = vsel %vm463, %v893, 0.0
    %v928 = vsel %vm464, %v897, 0.0
    %v929 = vsel %vm465, %v901, 0.0
    %v930 = vsel %vm466, %v905, 0.0
    %v931 = vsel %vm467, %v909, 0.0
    %v932 = vsel %vm468, %v913, 0.0
    %v933 = vsel %vm469, %v917, 0.0
    %v934 = vsel %vm136, %v926, 0.0
    %935 = vadd.xlane.f32.xlu0 %v934
    %v936 = vpop.xlane.xlu0 %935
    %v937 = vsel %vm136, %v927, 0.0
    %938 = vadd.xlane.f32.xlu0 %v937
    %v939 = vpop.xlane.xlu0 %938
    %v940 = vsel %vm136, %v928, 0.0
    %941 = vadd.xlane.f32.xlu0 %v940
    %v942 = vpop.xlane.xlu0 %941
    %v943 = vsel %vm136, %v929, 0.0
    %944 = vadd.xlane.f32.xlu0 %v943
    %v945 = vpop.xlane.xlu0 %944
    %v946 = vsel %vm136, %v930, 0.0
    %947 = vadd.xlane.f32.xlu0 %v946
    %v948 = vpop.xlane.xlu0 %947
    %v949 = vsel %vm136, %v931, 0.0
    %950 = vadd.xlane.f32.xlu0 %v949
    %v951 = vpop.xlane.xlu0 %950
    %v952 = vsel %vm136, %v932, 0.0
    %953 = vadd.xlane.f32.xlu0 %v952
    %v954 = vpop.xlane.xlu0 %953
    %v955 = vsel %vm136, %v933, 0.0
    %956 = vadd.xlane.f32.xlu0 %v955
    %v957 = vpop.xlane.xlu0 %956
    %v966 = vlaneseq
    %v967 = vshrl.u32 %v966, 7
    %v968 = vsub.s32 %v341, %v967
    %v969 = vrot.slane %v570, %v968
    %v970 = vlaneseq
    %v971 = vshrl.u32 %v970, 7
    %v972 = vsub.s32 %v341, %v971
    %v973 = vrot.slane %v573, %v972
    %v974 = vlaneseq
    %v975 = vshrl.u32 %v974, 7
    %v976 = vsub.s32 %v341, %v975
    %v977 = vrot.slane %v576, %v976
    %v978 = vlaneseq
    %v979 = vshrl.u32 %v978, 7
    %v980 = vsub.s32 %v341, %v979
    %v981 = vrot.slane %v579, %v980
    %v982 = vlaneseq
    %v983 = vshrl.u32 %v982, 7
    %v984 = vsub.s32 %v341, %v983
    %v985 = vrot.slane %v582, %v984
    %v986 = vlaneseq
    %v987 = vshrl.u32 %v986, 7
    %v988 = vsub.s32 %v341, %v987
    %v989 = vrot.slane %v585, %v988
    %v990 = vlaneseq
    %v991 = vshrl.u32 %v990, 7
    %v992 = vsub.s32 %v341, %v991
    %v993 = vrot.slane %v588, %v992
    %v994 = vlaneseq
    %v995 = vshrl.u32 %v994, 7
    %v996 = vsub.s32 %v341, %v995
    %v997 = vrot.slane %v591, %v996
    %vm998 = vcmask 1041409
    %v999 = vsel %vm998, %v973, %v969
    %vm1000 = vcmask 1042434
    %v1001 = vsel %vm1000, %v977, %v999
    %vm1002 = vcmask 1043459
    %v1003 = vsel %vm1002, %v981, %v1001
    %vm1004 = vcmask 1044484
    %v1005 = vsel %vm1004, %v985, %v1003
    %vm1006 = vcmask 1045509
    %v1007 = vsel %vm1006, %v989, %v1005
    %vm1008 = vcmask 1046534
    %v1009 = vsel %vm1008, %v993, %v1007
    %vm1010 = vcmask 1047559
    %v1011 = vsel %vm1010, %v997, %v1009
    %v1013 = vadd.f32 %v178, %v1011
    %v1014 = vadd.f32 %v1013, %v132
    %v1015 = vsel %vm136, %v1014, -inf
    %1016 = vmax.xlane.f32.xlu0 %v1015
    %v1017 = vpop.xlane.xlu0 %1016
    %v1018 = vsub.f32 %v1014, %v1017
    %v1019 = vmul.f32 %v1018, 1.442695
    %v1020 = vpow.pop %v1019
    %v1021 = vsel %vm136, %v1020, 0.0
    %1022 = vadd.xlane.f32.xlu0 %v1021
    %v1023 = vpop.xlane.xlu0 %1022
    %v1024 = vrcp.pop %v1023
    %v1025 = vmul.f32 %v1020, %v1024
    %v1034 = vlaneseq
    %v1035 = vshrl.u32 %v1034, 7
    %v1036 = vsub.s32 %v341, %v1035
    %v1037 = vrot.slane %v692, %v1036
    %v1038 = vlaneseq
    %v1039 = vshrl.u32 %v1038, 7
    %v1040 = vsub.s32 %v341, %v1039
    %v1041 = vrot.slane %v695, %v1040
    %v1042 = vlaneseq
    %v1043 = vshrl.u32 %v1042, 7
    %v1044 = vsub.s32 %v341, %v1043
    %v1045 = vrot.slane %v698, %v1044
    %v1046 = vlaneseq
    %v1047 = vshrl.u32 %v1046, 7
    %v1048 = vsub.s32 %v341, %v1047
    %v1049 = vrot.slane %v701, %v1048
    %v1050 = vlaneseq
    %v1051 = vshrl.u32 %v1050, 7
    %v1052 = vsub.s32 %v341, %v1051
    %v1053 = vrot.slane %v704, %v1052
    %v1054 = vlaneseq
    %v1055 = vshrl.u32 %v1054, 7
    %v1056 = vsub.s32 %v341, %v1055
    %v1057 = vrot.slane %v707, %v1056
    %v1058 = vlaneseq
    %v1059 = vshrl.u32 %v1058, 7
    %v1060 = vsub.s32 %v341, %v1059
    %v1061 = vrot.slane %v710, %v1060
    %v1062 = vlaneseq
    %v1063 = vshrl.u32 %v1062, 7
    %v1064 = vsub.s32 %v341, %v1063
    %v1065 = vrot.slane %v713, %v1064
    %v1066 = vsel %vm998, %v1041, %v1037
    %v1067 = vsel %vm1000, %v1045, %v1066
    %v1068 = vsel %vm1002, %v1049, %v1067
    %v1069 = vsel %vm1004, %v1053, %v1068
    %v1070 = vsel %vm1006, %v1057, %v1069
    %v1071 = vsel %vm1008, %v1061, %v1070
    %v1072 = vsel %vm1010, %v1065, %v1071
    %v1074 = vadd.f32 %v229, %v1072
    %v1075 = vadd.f32 %v1074, %v133
    %v1076 = vsel %vm136, %v1075, -inf
    %1077 = vmax.xlane.f32.xlu0 %v1076
    %v1078 = vpop.xlane.xlu0 %1077
    %v1079 = vsub.f32 %v1075, %v1078
    %v1080 = vmul.f32 %v1079, 1.442695
    %v1081 = vpow.pop %v1080
    %v1082 = vsel %vm136, %v1081, 0.0
    %1083 = vadd.xlane.f32.xlu0 %v1082
    %v1084 = vpop.xlane.xlu0 %1083
    %v1085 = vrcp.pop %v1084
    %v1086 = vmul.f32 %v1081, %v1085
    %v1087 = vpack.c.bf16 %v1025, %v1025
    %v1089 = vsel %vm136, %v1087, 0
    %vm1091 = vcmask 1043456
    %v1093 = vsel %vm1091, %v130, 0
    %1095 = vmatprep.subr.bf16.mxu0 0
    %1096 = vmatpush1.bf16.msra.mxu0 0
    %1097 = vmatprep.subr.bf16.mxu0 0
    %1098 = vmatpush1.bf16.msra.mxu0 0
    %1099 = vmatprep.subr.bf16.mxu0 0
    %1100 = vmatpush1.bf16.msra.mxu0 0
    %1101 = vmatprep.subr.bf16.mxu0 0
    %1102 = vmatpush1.bf16.msra.mxu0 0
    %1103 = vmatprep.subr.bf16.mxu0 0
    %1104 = vmatpush1.bf16.msra.mxu0 0
    %1105 = vmatprep.subr.bf16.mxu0 0
    %1106 = vmatpush1.bf16.msra.mxu0 0
    %1107 = vmatprep.subr.bf16.mxu0 0
    %1108 = vmatpush1.bf16.msra.mxu0 0
    %1109 = vmatprep.subr.bf16.mxu0 0
    %1110 = vmatpush1.bf16.msra.mxu0 %v1093
    %1111 = vmatprep.subr.bf16.mxu0 0
    %1112 = vmatpush2.bf16.msra.mxu0 0
    %1113 = vmatprep.subr.bf16.mxu0 0
    %1114 = vmatpush2.bf16.msra.mxu0 0
    %1115 = vmatprep.subr.bf16.mxu0 0
    %1116 = vmatpush2.bf16.msra.mxu0 0
    %1117 = vmatprep.subr.bf16.mxu0 0
    %1118 = vmatpush2.bf16.msra.mxu0 0
    %1119 = vmatprep.subr.bf16.mxu0 0
    %1120 = vmatpush2.bf16.msra.mxu0 0
    %1121 = vmatprep.subr.bf16.mxu0 0
    %1122 = vmatpush2.bf16.msra.mxu0 0
    %1123 = vmatprep.subr.bf16.mxu0 0
    %1124 = vmatpush2.bf16.msra.mxu0 0
    %1125 = vmatprep.subr.bf16.mxu0 0
    %1126 = vmatpush2.bf16.msra.mxu0 0
    %1127 = vmatprep.mubr.bf16.mxu0 0
    %1128 = vmatmul.mubr.bf16.gmra.mxu0 %v1089
    %v1129 = vpop.f32.mrf.mxu0
    %v1130 = vadd.f32 0.0, %v1129
    %v1131 = vpop.f32.mrf.mxu0
    %v1132 = vpop.f32.mrf.mxu0
    %v1133 = vpop.f32.mrf.mxu0
    %1134 = vdwg.mxu0
    %v1135 = vpack.c.bf16 %v1086, %v1086
    %v1137 = vsel %vm136, %v1135, 0
    %v1140 = vsel %vm1091, %v131, 0
    %1142 = vmatprep.subr.bf16.mxu0 0
    %1143 = vmatpush1.bf16.msra.mxu0 0
    %1144 = vmatprep.subr.bf16.mxu0 0
    %1145 = vmatpush1.bf16.msra.mxu0 0
    %1146 = vmatprep.subr.bf16.mxu0 0
    %1147 = vmatpush1.bf16.msra.mxu0 0
    %1148 = vmatprep.subr.bf16.mxu0 0
    %1149 = vmatpush1.bf16.msra.mxu0 0
    %1150 = vmatprep.subr.bf16.mxu0 0
    %1151 = vmatpush1.bf16.msra.mxu0 0
    %1152 = vmatprep.subr.bf16.mxu0 0
    %1153 = vmatpush1.bf16.msra.mxu0 0
    %1154 = vmatprep.subr.bf16.mxu0 0
    %1155 = vmatpush1.bf16.msra.mxu0 0
    %1156 = vmatprep.subr.bf16.mxu0 0
    %1157 = vmatpush1.bf16.msra.mxu0 %v1140
    %1158 = vmatprep.subr.bf16.mxu0 0
    %1159 = vmatpush2.bf16.msra.mxu0 0
    %1160 = vmatprep.subr.bf16.mxu0 0
    %1161 = vmatpush2.bf16.msra.mxu0 0
    %1162 = vmatprep.subr.bf16.mxu0 0
    %1163 = vmatpush2.bf16.msra.mxu0 0
    %1164 = vmatprep.subr.bf16.mxu0 0
    %1165 = vmatpush2.bf16.msra.mxu0 0
    %1166 = vmatprep.subr.bf16.mxu0 0
    %1167 = vmatpush2.bf16.msra.mxu0 0
    %1168 = vmatprep.subr.bf16.mxu0 0
    %1169 = vmatpush2.bf16.msra.mxu0 0
    %1170 = vmatprep.subr.bf16.mxu0 0
    %1171 = vmatpush2.bf16.msra.mxu0 0
    %1172 = vmatprep.subr.bf16.mxu0 0
    %1173 = vmatpush2.bf16.msra.mxu0 0
    %1174 = vmatprep.mubr.bf16.mxu0 0
    %1175 = vmatmul.mubr.bf16.gmra.mxu0 %v1137
    %v1176 = vpop.f32.mrf.mxu0
    %v1177 = vadd.f32 0.0, %v1176
    %v1178 = vpop.f32.mrf.mxu0
    %v1179 = vpop.f32.mrf.mxu0
    %v1180 = vpop.f32.mrf.mxu0
    %1181 = vdwg.mxu0
    %v1190 = vlaneseq
    %v1191 = vshrl.u32 %v1190, 7
    %v1192 = vsub.s32 %v341, %v1191
    %v1193 = vrot.slane %v814, %v1192
    %v1194 = vlaneseq
    %v1195 = vshrl.u32 %v1194, 7
    %v1196 = vsub.s32 %v341, %v1195
    %v1197 = vrot.slane %v817, %v1196
    %v1198 = vlaneseq
    %v1199 = vshrl.u32 %v1198, 7
    %v1200 = vsub.s32 %v341, %v1199
    %v1201 = vrot.slane %v820, %v1200
    %v1202 = vlaneseq
    %v1203 = vshrl.u32 %v1202, 7
    %v1204 = vsub.s32 %v341, %v1203
    %v1205 = vrot.slane %v823, %v1204
    %v1206 = vlaneseq
    %v1207 = vshrl.u32 %v1206, 7
    %v1208 = vsub.s32 %v341, %v1207
    %v1209 = vrot.slane %v826, %v1208
    %v1210 = vlaneseq
    %v1211 = vshrl.u32 %v1210, 7
    %v1212 = vsub.s32 %v341, %v1211
    %v1213 = vrot.slane %v829, %v1212
    %v1214 = vlaneseq
    %v1215 = vshrl.u32 %v1214, 7
    %v1216 = vsub.s32 %v341, %v1215
    %v1217 = vrot.slane %v832, %v1216
    %v1218 = vlaneseq
    %v1219 = vshrl.u32 %v1218, 7
    %v1220 = vsub.s32 %v341, %v1219
    %v1221 = vrot.slane %v835, %v1220
    %v1222 = vsel %vm998, %v1197, %v1193
    %v1223 = vsel %vm1000, %v1201, %v1222
    %v1224 = vsel %vm1002, %v1205, %v1223
    %v1225 = vsel %vm1004, %v1209, %v1224
    %v1226 = vsel %vm1006, %v1213, %v1225
    %v1227 = vsel %vm1008, %v1217, %v1226
    %v1228 = vsel %vm1010, %v1221, %v1227
    %v1230 = vadd.f32 %v282, %v1228
    %v1231 = vadd.f32 %v1230, %v132
    %v1232 = vsel %vm136, %v1231, -inf
    %1233 = vmax.xlane.f32.xlu0 %v1232
    %v1234 = vpop.xlane.xlu0 %1233
    %v1235 = vsub.f32 %v1231, %v1234
    %v1236 = vmul.f32 %v1235, 1.442695
    %v1237 = vpow.pop %v1236
    %v1238 = vsel %vm136, %v1237, 0.0
    %1239 = vadd.xlane.f32.xlu0 %v1238
    %v1240 = vpop.xlane.xlu0 %1239
    %v1241 = vrcp.pop %v1240
    %v1242 = vmul.f32 %v1237, %v1241
    %v1251 = vlaneseq
    %v1252 = vshrl.u32 %v1251, 7
    %v1253 = vsub.s32 %v341, %v1252
    %v1254 = vrot.slane %v936, %v1253
    %v1255 = vlaneseq
    %v1256 = vshrl.u32 %v1255, 7
    %v1257 = vsub.s32 %v341, %v1256
    %v1258 = vrot.slane %v939, %v1257
    %v1259 = vlaneseq
    %v1260 = vshrl.u32 %v1259, 7
    %v1261 = vsub.s32 %v341, %v1260
    %v1262 = vrot.slane %v942, %v1261
    %v1263 = vlaneseq
    %v1264 = vshrl.u32 %v1263, 7
    %v1265 = vsub.s32 %v341, %v1264
    %v1266 = vrot.slane %v945, %v1265
    %v1267 = vlaneseq
    %v1268 = vshrl.u32 %v1267, 7
    %v1269 = vsub.s32 %v341, %v1268
    %v1270 = vrot.slane %v948, %v1269
    %v1271 = vlaneseq
    %v1272 = vshrl.u32 %v1271, 7
    %v1273 = vsub.s32 %v341, %v1272
    %v1274 = vrot.slane %v951, %v1273
    %v1275 = vlaneseq
    %v1276 = vshrl.u32 %v1275, 7
    %v1277 = vsub.s32 %v341, %v1276
    %v1278 = vrot.slane %v954, %v1277
    %v1279 = vlaneseq
    %v1280 = vshrl.u32 %v1279, 7
    %v1281 = vsub.s32 %v341, %v1280
    %v1282 = vrot.slane %v957, %v1281
    %v1283 = vsel %vm998, %v1258, %v1254
    %v1284 = vsel %vm1000, %v1262, %v1283
    %v1285 = vsel %vm1002, %v1266, %v1284
    %v1286 = vsel %vm1004, %v1270, %v1285
    %v1287 = vsel %vm1006, %v1274, %v1286
    %v1288 = vsel %vm1008, %v1278, %v1287
    %v1289 = vsel %vm1010, %v1282, %v1288
    %v1291 = vadd.f32 %v335, %v1289
    %v1292 = vadd.f32 %v1291, %v133
    %v1293 = vsel %vm136, %v1292, -inf
    %1294 = vmax.xlane.f32.xlu0 %v1293
    %v1295 = vpop.xlane.xlu0 %1294
    %v1296 = vsub.f32 %v1292, %v1295
    %v1297 = vmul.f32 %v1296, 1.442695
    %v1298 = vpow.pop %v1297
    %v1299 = vsel %vm136, %v1298, 0.0
    %1300 = vadd.xlane.f32.xlu0 %v1299
    %v1301 = vpop.xlane.xlu0 %1300
    %v1302 = vrcp.pop %v1301
    %v1303 = vmul.f32 %v1298, %v1302
    %v1304 = vpack.c.bf16 %v1242, %v1242
    %v1306 = vunpack.c.l.b16 %v130
    %v1307 = vpack.c.b16 %v1306, %v1306
    %1308 = vrot.lane.b32.xlu0 %v1307, 120
    %v1309 = vpop.permute.xlu0 %1308
    %v1311 = vsel %vm136, %v1304, 0
    %v1314 = vsel %vm1091, %v1309, 0
    %1316 = vmatprep.subr.bf16.mxu0 0
    %1317 = vmatpush1.bf16.msra.mxu0 0
    %1318 = vmatprep.subr.bf16.mxu0 0
    %1319 = vmatpush1.bf16.msra.mxu0 0
    %1320 = vmatprep.subr.bf16.mxu0 0
    %1321 = vmatpush1.bf16.msra.mxu0 0
    %1322 = vmatprep.subr.bf16.mxu0 0
    %1323 = vmatpush1.bf16.msra.mxu0 0
    %1324 = vmatprep.subr.bf16.mxu0 0
    %1325 = vmatpush1.bf16.msra.mxu0 0
    %1326 = vmatprep.subr.bf16.mxu0 0
    %1327 = vmatpush1.bf16.msra.mxu0 0
    %1328 = vmatprep.subr.bf16.mxu0 0
    %1329 = vmatpush1.bf16.msra.mxu0 0
    %1330 = vmatprep.subr.bf16.mxu0 0
    %1331 = vmatpush1.bf16.msra.mxu0 %v1314
    %1332 = vmatprep.subr.bf16.mxu0 0
    %1333 = vmatpush2.bf16.msra.mxu0 0
    %1334 = vmatprep.subr.bf16.mxu0 0
    %1335 = vmatpush2.bf16.msra.mxu0 0
    %1336 = vmatprep.subr.bf16.mxu0 0
    %1337 = vmatpush2.bf16.msra.mxu0 0
    %1338 = vmatprep.subr.bf16.mxu0 0
    %1339 = vmatpush2.bf16.msra.mxu0 0
    %1340 = vmatprep.subr.bf16.mxu0 0
    %1341 = vmatpush2.bf16.msra.mxu0 0
    %1342 = vmatprep.subr.bf16.mxu0 0
    %1343 = vmatpush2.bf16.msra.mxu0 0
    %1344 = vmatprep.subr.bf16.mxu0 0
    %1345 = vmatpush2.bf16.msra.mxu0 0
    %1346 = vmatprep.subr.bf16.mxu0 0
    %1347 = vmatpush2.bf16.msra.mxu0 0
    %1348 = vmatprep.mubr.bf16.mxu0 0
    %1349 = vmatmul.mubr.bf16.gmra.mxu0 %v1311
    %v1350 = vpop.f32.mrf.mxu0
    %v1351 = vadd.f32 0.0, %v1350
    %v1352 = vpop.f32.mrf.mxu0
    %v1353 = vpop.f32.mrf.mxu0
    %v1354 = vpop.f32.mrf.mxu0
    %1355 = vdwg.mxu0
    %v1356 = vpack.c.bf16 %v1303, %v1303
    %v1358 = vunpack.c.l.b16 %v131
    %v1359 = vpack.c.b16 %v1358, %v1358
    %1360 = vrot.lane.b32.xlu0 %v1359, 120
    %v1361 = vpop.permute.xlu0 %1360
    %v1363 = vsel %vm136, %v1356, 0
    %v1366 = vsel %vm1091, %v1361, 0
    %1368 = vmatprep.subr.bf16.mxu0 0
    %1369 = vmatpush1.bf16.msra.mxu0 0
    %1370 = vmatprep.subr.bf16.mxu0 0
    %1371 = vmatpush1.bf16.msra.mxu0 0
    %1372 = vmatprep.subr.bf16.mxu0 0
    %1373 = vmatpush1.bf16.msra.mxu0 0
    %1374 = vmatprep.subr.bf16.mxu0 0
    %1375 = vmatpush1.bf16.msra.mxu0 0
    %1376 = vmatprep.subr.bf16.mxu0 0
    %1377 = vmatpush1.bf16.msra.mxu0 0
    %1378 = vmatprep.subr.bf16.mxu0 0
    %1379 = vmatpush1.bf16.msra.mxu0 0
    %1380 = vmatprep.subr.bf16.mxu0 0
    %1381 = vmatpush1.bf16.msra.mxu0 0
    %1382 = vmatprep.subr.bf16.mxu0 0
    %1383 = vmatpush1.bf16.msra.mxu0 %v1366
    %1384 = vmatprep.subr.bf16.mxu0 0
    %1385 = vmatpush2.bf16.msra.mxu0 0
    %1386 = vmatprep.subr.bf16.mxu0 0
    %1387 = vmatpush2.bf16.msra.mxu0 0
    %1388 = vmatprep.subr.bf16.mxu0 0
    %1389 = vmatpush2.bf16.msra.mxu0 0
    %1390 = vmatprep.subr.bf16.mxu0 0
    %1391 = vmatpush2.bf16.msra.mxu0 0
    %1392 = vmatprep.subr.bf16.mxu0 0
    %1393 = vmatpush2.bf16.msra.mxu0 0
    %1394 = vmatprep.subr.bf16.mxu0 0
    %1395 = vmatpush2.bf16.msra.mxu0 0
    %1396 = vmatprep.subr.bf16.mxu0 0
    %1397 = vmatpush2.bf16.msra.mxu0 0
    %1398 = vmatprep.subr.bf16.mxu0 0
    %1399 = vmatpush2.bf16.msra.mxu0 0
    %1400 = vmatprep.mubr.bf16.mxu0 0
    %1401 = vmatmul.mubr.bf16.gmra.mxu0 %v1363
    %v1402 = vpop.f32.mrf.mxu0
    %v1403 = vadd.f32 0.0, %v1402
    %v1404 = vpop.f32.mrf.mxu0
    %v1405 = vpop.f32.mrf.mxu0
    %v1406 = vpop.f32.mrf.mxu0
    %1407 = vdwg.mxu0
    %1409 = vrot.lane.b32.xlu0 %v1351, 8
    %v1410 = vpop.permute.xlu0 %1409
    %1413 = vrot.lane.b32.xlu0 %v1177, 16
    %v1414 = vpop.permute.xlu0 %1413
    %1417 = vrot.lane.b32.xlu0 %v1403, 24
    %v1418 = vpop.permute.xlu0 %1417
    %v1420 = vsel %vm136, %v1130, %v1410
    %vm1421 = vcmask 130048
    %v1422 = vsel %vm1421, %v1420, %v1414
    %vm1423 = vcmask 195584
    %v1424 = vsel %vm1423, %v1422, %v1418
    %vm1425 = vcmask 261120
    %1426 = vst.msk [vmem:[#allocation16] sm:$0xff] %vm1425, %v1424
    // Predicated region
    $region70: #{tpu_custom_call.1} parent=1 // pred_check
      _
    $region71: #{tpu_custom_call.1} parent=1 // pred_check_branch
      %1428 = sbr.rel (0) target = $region73
    $region72: #{tpu_custom_call.1} parent=1 // pred_region
      %s1430 = ssub.s32 128, 128
      %1431 = vsyncadd [#allocation4], %s1430
      %s1433 = sshll.u32 [#allocation16], 4
      %s1434 = int_to_ptr.vmem [resolvable:$true] %s1433
      %1436 = dma.vmem_to_hbm [thread:$0]  %s1434, 128, %s9, [#allocation4]
    $region73: #{tpu_custom_call.1} parent=1 // pred_fallthru
      _
    // Predicated region
    $region74: #{tpu_custom_call.1} parent=1 // pred_check
      _
    $region75: #{tpu_custom_call.1} parent=1 // pred_check_branch
      %1438 = sbr.rel (0) target = $region77
    $region76: #{tpu_custom_call.1} parent=1 // pred_region
      %1439 = dma.done [#allocation4], 128
    $region77: #{tpu_custom_call.1} parent=1 // pred_fallthru
      _
    %1440 = vsyncpa [#allocation3], 1
    %1441 = vsyncpa [#allocation6], 1
    %1442 = vsyncpa [#allocation9], 1
    %1443 = vsyncpa [#allocation12], 1
    %1444 = vsyncpa [#allocation15], 1
    %1445 = vsyncpa [#allocation4], 1

</llo_original>
